<compile_context>
chip_gen: v7x
topology: tpu7x:2x2x1
jax: 0.10.0
libtpu: 0.0.40
codegen_flags: <defaults>
</compile_context>

<pallas_src>
import functools

import jax
import jax.numpy as jnp
from jax.experimental import pallas as pl
from jax.experimental.pallas import tpu as pltpu

HIDDEN = 128      # hidden_dim['image'] in the module
FUSE_H = 256      # fuseOut: Linear(128, 256) -> Dropout -> Linear(256, 1)
T_CHUNK_MAX = 64  # timesteps per grid step (bounds gx VMEM, enables pipelining)


# ------------------------------ Pallas kernel -------------------------------

def fused_kernel(x_ref, wih_ref, whh_ref, b_ref, wc_ref, bc_ref,
                 out_ref, gx_scr, h_scr, c_scr, *, t_chunk, n_pad):
    """One time-chunk of the LSTM recurrence with the collapsed fuseOut folded in.

    x_ref   : (t_chunk*n_pad, D)   bf16, time-major flattened (row = t*n_pad + n)
    wih_ref : (D, 4H) bf16         whh_ref : (H, 4H) bf16
    b_ref   : (1, 4H) f32          (b_ih + b_hh)
    wc_ref  : (1, H)  f32          collapsed fuseOut weight (fuse_w2 @ fuse_w1)
    bc_ref  : (1, 1)  f32          collapsed fuseOut bias
    out_ref : (t_chunk*n_pad, 1) f32   (unmasked fuseOut output, time-major)
    gx_scr  : (t_chunk*n_pad, 4H) f32  VMEM scratch (hoisted input projection)
    h_scr/c_scr : (n_pad, H) f32       VMEM carries across grid steps
    """
    H = HIDDEN

    @pl.when(pl.program_id(0) == 0)
    def _():
        h_scr[...] = jnp.zeros_like(h_scr)
        c_scr[...] = jnp.zeros_like(c_scr)

    # (1) Hoisted input projection: one MXU matmul over the whole chunk.
    gx_scr[...] = (
        jnp.dot(x_ref[...], wih_ref[...], preferred_element_type=jnp.float32)
        + b_ref[...])                                      # (t_chunk*n_pad, 4H)

    whh = whh_ref[...]                                     # (H, 4H) bf16, hoisted
    wc = wc_ref[...]                                       # (1, H)  f32, hoisted
    bc = bc_ref[...]                                       # (1, 1)  f32

    # (2) Sequential recurrence: only h @ W_hh^T per step + gate math.
    #     Gate order i, f, g, o (PyTorch LSTMCell).  Gates / cell state f32.
    def step(t, carry):
        h, c = carry
        row = pl.multiple_of(t * n_pad, 8)                 # sublane-aligned slice
        gates = gx_scr[pl.ds(row, n_pad), :] + jnp.dot(
            h.astype(jnp.bfloat16), whh, preferred_element_type=jnp.float32)
        i = jax.nn.sigmoid(gates[:, 0 * H:1 * H])
        f = jax.nn.sigmoid(gates[:, 1 * H:2 * H])
        g = jnp.tanh(gates[:, 2 * H:3 * H])
        o = jax.nn.sigmoid(gates[:, 3 * H:4 * H])
        c_new = f * c + i * g
        h_new = o * jnp.tanh(c_new)
        # Collapsed fuseOut folded into the step: lane-reduce on the XLU.
        out_ref[pl.ds(row, n_pad), :] = (
            jnp.sum(h_new * wc, axis=1, keepdims=True) + bc)
        return h_new, c_new

    h0, c0 = h_scr[...], c_scr[...]
    hT, cT = jax.lax.fori_loop(0, t_chunk, step, (h0, c0),
                               unroll=min(t_chunk, 8))
    h_scr[...] = hT
    c_scr[...] = cT


# --------------------------------- wrapper -----------------------------------

def _vmem_limit_bytes(t_chunk, n_pad, d):
    h4 = 4 * HIDDEN
    x_blk = t_chunk * n_pad * d * 2                 # bf16 input block
    out_blk = t_chunk * n_pad * 4                   # f32 output block
    weights = (d * h4 + HIDDEN * h4) * 2 + (h4 + HIDDEN + 1) * 4
    scratch = t_chunk * n_pad * h4 * 4 + 2 * n_pad * HIDDEN * 4
    est = 2 * (x_blk + out_blk) + 2 * weights + scratch + (4 << 20)
    return int(min(max(est, 8 << 20), 128 << 20))


@jax.jit
def async_naive_forward(x_ntd, seq_length, lstm_masks, params):
    """x_ntd: (N, T, D) padded features, lstm_masks: (N, T, 1). Returns (N, T, 1) f32."""
    del seq_length  # sequence gating is applied through lstm_masks
    N, T, D = x_ntd.shape
    n_pad = -(-N // 8) * 8                      # sublane-aligned batch
    t_chunk = min(T, T_CHUNK_MAX)
    t_pad = -(-T // t_chunk) * t_chunk
    n_chunks = t_pad // t_chunk

    # bf16 BEFORE the transpose -> half the HBM traffic of the layout op.
    x_bf = x_ntd.astype(jnp.bfloat16)
    x_bf = jnp.pad(x_bf, ((0, n_pad - N), (0, t_pad - T), (0, 0)))
    x_flat = jnp.transpose(x_bf, (1, 0, 2)).reshape(t_pad * n_pad, D)

    wih_t = params["w_ih"].T.astype(jnp.bfloat16)                    # (D, 4H)
    whh_t = params["w_hh"].T.astype(jnp.bfloat16)                    # (H, 4H)
    b = (params["b_ih"] + params["b_hh"]).reshape(1, 4 * HIDDEN).astype(jnp.float32)
    # Collapsed fuseOut (Dropout = identity at inference): purely affine.
    wc = (params["fuse_w2"] @ params["fuse_w1"]).astype(jnp.float32)  # (1, H)
    bc = (params["fuse_w2"] @ params["fuse_b1"]
          + params["fuse_b2"]).reshape(1, 1).astype(jnp.float32)      # (1, 1)

    kernel = functools.partial(fused_kernel, t_chunk=t_chunk, n_pad=n_pad)

    out_flat = pl.pallas_call(
        kernel,
        out_shape=jax.ShapeDtypeStruct((t_pad * n_pad, 1), jnp.float32),
        grid_spec=pltpu.PrefetchScalarGridSpec(
            num_scalar_prefetch=0,
            grid=(n_chunks,),
            in_specs=[
                pl.BlockSpec((t_chunk * n_pad, D), lambda t: (t, 0)),
                pl.BlockSpec((D, 4 * HIDDEN), lambda t: (0, 0)),
                pl.BlockSpec((HIDDEN, 4 * HIDDEN), lambda t: (0, 0)),
                pl.BlockSpec((1, 4 * HIDDEN), lambda t: (0, 0)),
                pl.BlockSpec((1, HIDDEN), lambda t: (0, 0)),
                pl.BlockSpec((1, 1), lambda t: (0, 0)),
            ],
            out_specs=pl.BlockSpec((t_chunk * n_pad, 1), lambda t: (t, 0)),
            scratch_shapes=[
                pltpu.VMEM((t_chunk * n_pad, 4 * HIDDEN), jnp.float32),
                pltpu.VMEM((n_pad, HIDDEN), jnp.float32),
                pltpu.VMEM((n_pad, HIDDEN), jnp.float32),
            ],
        ),
        compiler_params=pltpu.CompilerParams(
            dimension_semantics=("arbitrary",),
            vmem_limit_bytes=_vmem_limit_bytes(t_chunk, n_pad, D)),
    )(x_flat, wih_t, whh_t, b, wc, bc)

    # Tiny tensor: time-major -> (N, T, 1), drop padding, apply output mask.
    out = jnp.transpose(out_flat.reshape(t_pad, n_pad, 1), (1, 0, 2))[:N, :T]
    return out * lstm_masks.astype(jnp.float32)


# ----------------------------- pure-JAX reference ----------------------------

def reference_forward(x_ntd, seq_length, lstm_masks, params):
    N, T, D = x_ntd.shape
    wih, whh = params["w_ih"], params["w_hh"]
    b = params["b_ih"] + params["b_hh"]

    def cell(carry, x_t):
        h, c = carry
        gates = x_t @ wih.T + h @ whh.T + b
        i, f, g, o = jnp.split(gates, 4, axis=-1)
        i, f, o = jax.nn.sigmoid(i), jax.nn.sigmoid(f), jax.nn.sigmoid(o)
        g = jnp.tanh(g)
        c = f * c + i * g
        h = o * jnp.tanh(c)
        return (h, c), h

    x_tnd = jnp.transpose(x_ntd.astype(jnp.float32), (1, 0, 2))
    init = (jnp.zeros((N, HIDDEN), jnp.float32), jnp.zeros((N, HIDDEN), jnp.float32))
    _, hs = jax.lax.scan(cell, init, x_tnd)                     # (T, N, H)
    # Torch leaves hidden states past seq_length at zero before fuseOut.
    step_mask = (jnp.arange(T)[:, None] < seq_length[None, :]).astype(jnp.float32)
    hs = hs * step_mask[..., None]
    hs = jnp.transpose(hs, (1, 0, 2))                           # (N, T, H)
    h1 = hs @ params["fuse_w1"].T + params["fuse_b1"]
    out = h1 @ params["fuse_w2"].T + params["fuse_b2"]
    return out * lstm_masks.astype(jnp.float32)


# ----------------------------------- main ------------------------------------

def init_params(key, in_dim):
    ks = jax.random.split(key, 8)
    k_lstm = 1.0 / jnp.sqrt(float(HIDDEN))
    k1 = 1.0 / jnp.sqrt(float(HIDDEN))
    k2 = 1.0 / jnp.sqrt(float(FUSE_H))
    u = lambda k, shape, bound: jax.random.uniform(
        k, shape, jnp.float32, minval=-bound, maxval=bound)
    return {
        "w_ih": u(ks[0], (4 * HIDDEN, in_dim), k_lstm),
        "w_hh": u(ks[1], (4 * HIDDEN, HIDDEN), k_lstm),
        "b_ih": u(ks[2], (4 * HIDDEN,), k_lstm),
        "b_hh": u(ks[3], (4 * HIDDEN,), k_lstm),
        "fuse_w1": u(ks[4], (FUSE_H, HIDDEN), k1),
        "fuse_b1": u(ks[5], (FUSE_H,), k1),
        "fuse_w2": u(ks[6], (1, FUSE_H), k2),
        "fuse_b2": u(ks[7], (1,), k2),
    }


if __name__ == "__main__":
    # TODO(synk): the original module consumes ragged dict-of-dicts inputs with
    # a variable number of features per timestep per modality; here they are
    # modeled as a dense padded (N, T, D) tensor with one feature per step.
    N, T, D = 2, 8, 32   # batch, max seq len, dims['image']

    key = jax.random.PRNGKey(0)
    k_param, k_x = jax.random.split(key)
    params = init_params(k_param, D)

    x = jax.random.normal(k_x, (N, T, D), jnp.float32)
    seq_length = jnp.array([8, 5], jnp.int32)
    lstm_masks = (jnp.arange(T)[None, :] < seq_length[:, None]
                  ).astype(jnp.float32).reshape(N, T, 1)

    out = async_naive_forward(x, seq_length, lstm_masks, params)
    out = jax.block_until_ready(out)

    ref = reference_forward(x, seq_length, lstm_masks, params)
    assert out.shape == (N, T, 1)
    assert jnp.allclose(out, ref, rtol=2e-2, atol=2e-2), (
        f"max abs err {jnp.max(jnp.abs(out - ref))}")

    print("KERNEL_OK")
</pallas_src>

<mosaic_0001>
module attributes {stable_mosaic.version = 11 : i64} {
  func.func @fused_kernel(%arg0: i32, %arg1: memref<64x32xbf16, #tpu.memory_space<vmem>>, %arg2: memref<32x512xbf16, #tpu.memory_space<vmem>>, %arg3: memref<128x512xbf16, #tpu.memory_space<vmem>>, %arg4: memref<1x512xf32, #tpu.memory_space<vmem>>, %arg5: memref<1x128xf32, #tpu.memory_space<vmem>>, %arg6: memref<1x1xf32, #tpu.memory_space<vmem>>, %arg7: memref<64x1xf32, #tpu.memory_space<vmem>>, %arg8: memref<64x512xf32, #tpu.memory_space<vmem>>, %arg9: memref<8x128xf32, #tpu.memory_space<vmem>>, %arg10: memref<8x128xf32, #tpu.memory_space<vmem>>) attributes {dimension_semantics = [#tpu.dimension_semantics<arbitrary>], iteration_bounds = array<i64: 1>, scalar_prefetch = 0 : i64, scratch_operands = 3 : i64, tpu.core_type = #tpu.core_type<tc>, window_params = [{transform_indices = @transform_0, window_bounds = array<i64: 64, 32>}, {pipeline_mode = #tpu.pipeline_mode<synchronous>, transform_indices = @transform_1, window_bounds = array<i64: 32, 512>}, {pipeline_mode = #tpu.pipeline_mode<synchronous>, transform_indices = @transform_2, window_bounds = array<i64: 128, 512>}, {pipeline_mode = #tpu.pipeline_mode<synchronous>, transform_indices = @transform_3, window_bounds = array<i64: 1, 512>}, {pipeline_mode = #tpu.pipeline_mode<synchronous>, transform_indices = @transform_4, window_bounds = array<i64: 1, 128>}, {pipeline_mode = #tpu.pipeline_mode<synchronous>, transform_indices = @transform_5, window_bounds = array<i64: 1, 1>}, {transform_indices = @transform_6, window_bounds = array<i64: 64, 1>}]} {
    %c0_i32 = arith.constant 0 : i32
    %0 = arith.cmpi eq, %arg0, %c0_i32 : i32
    %1 = arith.extui %0 : i1 to i32
    %c0_i32_0 = arith.constant 0 : i32
    %2 = arith.cmpi ne, %1, %c0_i32_0 : i32
    scf.if %2 {
      %cst_87 = arith.constant 0.000000e+00 : f32
      %337 = vector.broadcast %cst_87 : f32 to vector<8x128xf32>
      %c0_88 = arith.constant 0 : index
      %c0_89 = arith.constant 0 : index
      %338 = vector.load %arg9[%c0_88, %c0_89] : memref<8x128xf32, #tpu.memory_space<vmem>>, vector<8x128xf32>
      tpu.vector_store %arg9[%c0_88, %c0_89], %337 {strides = array<i32>} : memref<8x128xf32, #tpu.memory_space<vmem>>, vector<8x128xf32>,
      %cst_90 = arith.constant 0.000000e+00 : f32
      %339 = vector.broadcast %cst_90 : f32 to vector<8x128xf32>
      %c0_91 = arith.constant 0 : index
      %c0_92 = arith.constant 0 : index
      %340 = vector.load %arg10[%c0_91, %c0_92] : memref<8x128xf32, #tpu.memory_space<vmem>>, vector<8x128xf32>
      tpu.vector_store %arg10[%c0_91, %c0_92], %339 {strides = array<i32>} : memref<8x128xf32, #tpu.memory_space<vmem>>, vector<8x128xf32>,
    } else {
    }
    %c0 = arith.constant 0 : index
    %c0_1 = arith.constant 0 : index
    %3 = vector.load %arg1[%c0, %c0_1] : memref<64x32xbf16, #tpu.memory_space<vmem>>, vector<64x32xbf16>
    %c0_2 = arith.constant 0 : index
    %c0_3 = arith.constant 0 : index
    %4 = vector.load %arg2[%c0_2, %c0_3] : memref<32x512xbf16, #tpu.memory_space<vmem>>, vector<32x512xbf16>
    %cst = arith.constant dense<0.000000e+00> : vector<64x512xf32>
    %5 = tpu.matmul %3, %4, %cst {dimension_numbers = #tpu.dot_dimension_numbers<[1], [0], [0], [1], [0, 0, 1, 1], [], []>} : vector<64x32xbf16>, vector<32x512xbf16>, vector<64x512xf32> -> vector<64x512xf32>
    %c0_4 = arith.constant 0 : index
    %c0_5 = arith.constant 0 : index
    %6 = vector.load %arg4[%c0_4, %c0_5] : memref<1x512xf32, #tpu.memory_space<vmem>>, vector<1x512xf32>
    %7 = vector.broadcast %6 : vector<1x512xf32> to vector<64x512xf32>
    %8 = arith.addf %5, %7 : vector<64x512xf32>
    %c0_6 = arith.constant 0 : index
    %c0_7 = arith.constant 0 : index
    %9 = vector.load %arg8[%c0_6, %c0_7] : memref<64x512xf32, #tpu.memory_space<vmem>>, vector<64x512xf32>
    tpu.vector_store %arg8[%c0_6, %c0_7], %8 {strides = array<i32>} : memref<64x512xf32, #tpu.memory_space<vmem>>, vector<64x512xf32>,
    %c0_8 = arith.constant 0 : index
    %c0_9 = arith.constant 0 : index
    %10 = vector.load %arg3[%c0_8, %c0_9] : memref<128x512xbf16, #tpu.memory_space<vmem>>, vector<128x512xbf16>
    %c0_10 = arith.constant 0 : index
    %c0_11 = arith.constant 0 : index
    %11 = vector.load %arg5[%c0_10, %c0_11] : memref<1x128xf32, #tpu.memory_space<vmem>>, vector<1x128xf32>
    %c0_12 = arith.constant 0 : index
    %c0_13 = arith.constant 0 : index
    %12 = vector.load %arg6[%c0_12, %c0_13] : memref<1x1xf32, #tpu.memory_space<vmem>>, vector<1x1xf32>
    %c0_14 = arith.constant 0 : index
    %c0_15 = arith.constant 0 : index
    %13 = vector.load %arg9[%c0_14, %c0_15] : memref<8x128xf32, #tpu.memory_space<vmem>>, vector<8x128xf32>
    %c0_16 = arith.constant 0 : index
    %c0_17 = arith.constant 0 : index
    %14 = vector.load %arg10[%c0_16, %c0_17] : memref<8x128xf32, #tpu.memory_space<vmem>>, vector<8x128xf32>
    %c0_i32_18 = arith.constant 0 : i32
    %c8_i32 = arith.constant 8 : i32
    %15 = arith.muli %c0_i32_18, %c8_i32 : i32
    %16 = tpu.assume_multiple %15, 8 : i32
    %17 = arith.index_cast %16 : i32 to index
    %c0_19 = arith.constant 0 : index
    %18 = vector.load %arg8[%17, %c0_19] : memref<64x512xf32, #tpu.memory_space<vmem>>, vector<8x512xf32>
    %19 = arith.truncf %13 : vector<8x128xf32> to vector<8x128xbf16>
    %cst_20 = arith.constant dense<0.000000e+00> : vector<8x512xf32>
    %20 = tpu.matmul %19, %10, %cst_20 {dimension_numbers = #tpu.dot_dimension_numbers<[1], [0], [0], [1], [0, 0, 1, 1], [], []>} : vector<8x128xbf16>, vector<128x512xbf16>, vector<8x512xf32> -> vector<8x512xf32>
    %21 = arith.addf %18, %20 : vector<8x512xf32>
    %22 = vector.extract_strided_slice %21 {offsets = [0, 0], sizes = [8, 128], strides = [1, 1]} : vector<8x512xf32> to vector<8x128xf32>
    %23 = arith.negf %22 : vector<8x128xf32>
    %24 = math.exp %23 : vector<8x128xf32>
    %cst_21 = arith.constant 1.000000e+00 : f32
    %25 = vector.broadcast %cst_21 : f32 to vector<8x128xf32>
    %26 = arith.addf %25, %24 : vector<8x128xf32>
    %27 = arith.divf %25, %26 : vector<8x128xf32>
    %28 = vector.extract_strided_slice %21 {offsets = [0, 128], sizes = [8, 128], strides = [1, 1]} : vector<8x512xf32> to vector<8x128xf32>
    %29 = arith.negf %28 : vector<8x128xf32>
    %30 = math.exp %29 : vector<8x128xf32>
    %cst_22 = arith.constant 1.000000e+00 : f32
    %31 = vector.broadcast %cst_22 : f32 to vector<8x128xf32>
    %32 = arith.addf %31, %30 : vector<8x128xf32>
    %33 = arith.divf %31, %32 : vector<8x128xf32>
    %34 = vector.extract_strided_slice %21 {offsets = [0, 256], sizes = [8, 128], strides = [1, 1]} : vector<8x512xf32> to vector<8x128xf32>
    %35 = math.tanh %34 : vector<8x128xf32>
    %36 = vector.extract_strided_slice %21 {offsets = [0, 384], sizes = [8, 128], strides = [1, 1]} : vector<8x512xf32> to vector<8x128xf32>
    %37 = arith.negf %36 : vector<8x128xf32>
    %38 = math.exp %37 : vector<8x128xf32>
    %cst_23 = arith.constant 1.000000e+00 : f32
    %39 = vector.broadcast %cst_23 : f32 to vector<8x128xf32>
    %40 = arith.addf %39, %38 : vector<8x128xf32>
    %41 = arith.divf %39, %40 : vector<8x128xf32>
    %42 = arith.mulf %33, %14 : vector<8x128xf32>
    %43 = arith.mulf %27, %35 : vector<8x128xf32>
    %44 = arith.addf %42, %43 : vector<8x128xf32>
    %45 = math.tanh %44 : vector<8x128xf32>
    %46 = arith.mulf %41, %45 : vector<8x128xf32>
    %47 = vector.broadcast %11 : vector<1x128xf32> to vector<8x128xf32>
    %48 = arith.mulf %46, %47 : vector<8x128xf32>
    %cst_24 = arith.constant dense<0.000000e+00> : vector<8xf32>
    %49 = vector.multi_reduction <add>, %48, %cst_24 [1] : vector<8x128xf32> to vector<8xf32>
    %50 = vector.shape_cast %49 : vector<8xf32> to vector<8x1xf32>
    %51 = vector.broadcast %12 : vector<1x1xf32> to vector<8x1xf32>
    %52 = arith.addf %50, %51 : vector<8x1xf32>
    %53 = arith.index_cast %16 : i32 to index
    %c0_25 = arith.constant 0 : index
    %54 = vector.load %arg7[%53, %c0_25] : memref<64x1xf32, #tpu.memory_space<vmem>>, vector<8x1xf32>
    tpu.vector_store %arg7[%53, %c0_25], %52 {strides = array<i32>} : memref<64x1xf32, #tpu.memory_space<vmem>>, vector<8x1xf32>,
    %c1_i32 = arith.constant 1 : i32
    %c8_i32_26 = arith.constant 8 : i32
    %55 = arith.muli %c1_i32, %c8_i32_26 : i32
    %56 = tpu.assume_multiple %55, 8 : i32
    %57 = arith.index_cast %56 : i32 to index
    %c0_27 = arith.constant 0 : index
    %58 = vector.load %arg8[%57, %c0_27] : memref<64x512xf32, #tpu.memory_space<vmem>>, vector<8x512xf32>
    %59 = arith.truncf %46 : vector<8x128xf32> to vector<8x128xbf16>
    %cst_28 = arith.constant dense<0.000000e+00> : vector<8x512xf32>
    %60 = tpu.matmul %59, %10, %cst_28 {dimension_numbers = #tpu.dot_dimension_numbers<[1], [0], [0], [1], [0, 0, 1, 1], [], []>} : vector<8x128xbf16>, vector<128x512xbf16>, vector<8x512xf32> -> vector<8x512xf32>
    %61 = arith.addf %58, %60 : vector<8x512xf32>
    %62 = vector.extract_strided_slice %61 {offsets = [0, 0], sizes = [8, 128], strides = [1, 1]} : vector<8x512xf32> to vector<8x128xf32>
    %63 = arith.negf %62 : vector<8x128xf32>
    %64 = math.exp %63 : vector<8x128xf32>
    %cst_29 = arith.constant 1.000000e+00 : f32
    %65 = vector.broadcast %cst_29 : f32 to vector<8x128xf32>
    %66 = arith.addf %65, %64 : vector<8x128xf32>
    %67 = arith.divf %65, %66 : vector<8x128xf32>
    %68 = vector.extract_strided_slice %61 {offsets = [0, 128], sizes = [8, 128], strides = [1, 1]} : vector<8x512xf32> to vector<8x128xf32>
    %69 = arith.negf %68 : vector<8x128xf32>
    %70 = math.exp %69 : vector<8x128xf32>
    %cst_30 = arith.constant 1.000000e+00 : f32
    %71 = vector.broadcast %cst_30 : f32 to vector<8x128xf32>
    %72 = arith.addf %71, %70 : vector<8x128xf32>
    %73 = arith.divf %71, %72 : vector<8x128xf32>
    %74 = vector.extract_strided_slice %61 {offsets = [0, 256], sizes = [8, 128], strides = [1, 1]} : vector<8x512xf32> to vector<8x128xf32>
    %75 = math.tanh %74 : vector<8x128xf32>
    %76 = vector.extract_strided_slice %61 {offsets = [0, 384], sizes = [8, 128], strides = [1, 1]} : vector<8x512xf32> to vector<8x128xf32>
    %77 = arith.negf %76 : vector<8x128xf32>
    %78 = math.exp %77 : vector<8x128xf32>
    %cst_31 = arith.constant 1.000000e+00 : f32
    %79 = vector.broadcast %cst_31 : f32 to vector<8x128xf32>
    %80 = arith.addf %79, %78 : vector<8x128xf32>
    %81 = arith.divf %79, %80 : vector<8x128xf32>
    %82 = arith.mulf %73, %44 : vector<8x128xf32>
    %83 = arith.mulf %67, %75 : vector<8x128xf32>
    %84 = arith.addf %82, %83 : vector<8x128xf32>
    %85 = math.tanh %84 : vector<8x128xf32>
    %86 = arith.mulf %81, %85 : vector<8x128xf32>
    %87 = vector.broadcast %11 : vector<1x128xf32> to vector<8x128xf32>
    %88 = arith.mulf %86, %87 : vector<8x128xf32>
    %cst_32 = arith.constant dense<0.000000e+00> : vector<8xf32>
    %89 = vector.multi_reduction <add>, %88, %cst_32 [1] : vector<8x128xf32> to vector<8xf32>
    %90 = vector.shape_cast %89 : vector<8xf32> to vector<8x1xf32>
    %91 = vector.broadcast %12 : vector<1x1xf32> to vector<8x1xf32>
    %92 = arith.addf %90, %91 : vector<8x1xf32>
    %93 = arith.index_cast %56 : i32 to index
    %c0_33 = arith.constant 0 : index
    %94 = vector.load %arg7[%93, %c0_33] : memref<64x1xf32, #tpu.memory_space<vmem>>, vector<8x1xf32>
    tpu.vector_store %arg7[%93, %c0_33], %92 {strides = array<i32>} : memref<64x1xf32, #tpu.memory_space<vmem>>, vector<8x1xf32>,
    %c2_i32 = arith.constant 2 : i32
    %c8_i32_34 = arith.constant 8 : i32
    %95 = arith.muli %c2_i32, %c8_i32_34 : i32
    %96 = tpu.assume_multiple %95, 8 : i32
    %97 = arith.index_cast %96 : i32 to index
    %c0_35 = arith.constant 0 : index
    %98 = vector.load %arg8[%97, %c0_35] : memref<64x512xf32, #tpu.memory_space<vmem>>, vector<8x512xf32>
    %99 = arith.truncf %86 : vector<8x128xf32> to vector<8x128xbf16>
    %cst_36 = arith.constant dense<0.000000e+00> : vector<8x512xf32>
    %100 = tpu.matmul %99, %10, %cst_36 {dimension_numbers = #tpu.dot_dimension_numbers<[1], [0], [0], [1], [0, 0, 1, 1], [], []>} : vector<8x128xbf16>, vector<128x512xbf16>, vector<8x512xf32> -> vector<8x512xf32>
    %101 = arith.addf %98, %100 : vector<8x512xf32>
    %102 = vector.extract_strided_slice %101 {offsets = [0, 0], sizes = [8, 128], strides = [1, 1]} : vector<8x512xf32> to vector<8x128xf32>
    %103 = arith.negf %102 : vector<8x128xf32>
    %104 = math.exp %103 : vector<8x128xf32>
    %cst_37 = arith.constant 1.000000e+00 : f32
    %105 = vector.broadcast %cst_37 : f32 to vector<8x128xf32>
    %106 = arith.addf %105, %104 : vector<8x128xf32>
    %107 = arith.divf %105, %106 : vector<8x128xf32>
    %108 = vector.extract_strided_slice %101 {offsets = [0, 128], sizes = [8, 128], strides = [1, 1]} : vector<8x512xf32> to vector<8x128xf32>
    %109 = arith.negf %108 : vector<8x128xf32>
    %110 = math.exp %109 : vector<8x128xf32>
    %cst_38 = arith.constant 1.000000e+00 : f32
    %111 = vector.broadcast %cst_38 : f32 to vector<8x128xf32>
    %112 = arith.addf %111, %110 : vector<8x128xf32>
    %113 = arith.divf %111, %112 : vector<8x128xf32>
    %114 = vector.extract_strided_slice %101 {offsets = [0, 256], sizes = [8, 128], strides = [1, 1]} : vector<8x512xf32> to vector<8x128xf32>
    %115 = math.tanh %114 : vector<8x128xf32>
    %116 = vector.extract_strided_slice %101 {offsets = [0, 384], sizes = [8, 128], strides = [1, 1]} : vector<8x512xf32> to vector<8x128xf32>
    %117 = arith.negf %116 : vector<8x128xf32>
    %118 = math.exp %117 : vector<8x128xf32>
    %cst_39 = arith.constant 1.000000e+00 : f32
    %119 = vector.broadcast %cst_39 : f32 to vector<8x128xf32>
    %120 = arith.addf %119, %118 : vector<8x128xf32>
    %121 = arith.divf %119, %120 : vector<8x128xf32>
    %122 = arith.mulf %113, %84 : vector<8x128xf32>
    %123 = arith.mulf %107, %115 : vector<8x128xf32>
    %124 = arith.addf %122, %123 : vector<8x128xf32>
    %125 = math.tanh %124 : vector<8x128xf32>
    %126 = arith.mulf %121, %125 : vector<8x128xf32>
    %127 = vector.broadcast %11 : vector<1x128xf32> to vector<8x128xf32>
    %128 = arith.mulf %126, %127 : vector<8x128xf32>
    %cst_40 = arith.constant dense<0.000000e+00> : vector<8xf32>
    %129 = vector.multi_reduction <add>, %128, %cst_40 [1] : vector<8x128xf32> to vector<8xf32>
    %130 = vector.shape_cast %129 : vector<8xf32> to vector<8x1xf32>
    %131 = vector.broadcast %12 : vector<1x1xf32> to vector<8x1xf32>
    %132 = arith.addf %130, %131 : vector<8x1xf32>
    %133 = arith.index_cast %96 : i32 to index
    %c0_41 = arith.constant 0 : index
    %134 = vector.load %arg7[%133, %c0_41] : memref<64x1xf32, #tpu.memory_space<vmem>>, vector<8x1xf32>
    tpu.vector_store %arg7[%133, %c0_41], %132 {strides = array<i32>} : memref<64x1xf32, #tpu.memory_space<vmem>>, vector<8x1xf32>,
    %c3_i32 = arith.constant 3 : i32
    %c8_i32_42 = arith.constant 8 : i32
    %135 = arith.muli %c3_i32, %c8_i32_42 : i32
    %136 = tpu.assume_multiple %135, 8 : i32
    %137 = arith.index_cast %136 : i32 to index
    %c0_43 = arith.constant 0 : index
    %138 = vector.load %arg8[%137, %c0_43] : memref<64x512xf32, #tpu.memory_space<vmem>>, vector<8x512xf32>
    %139 = arith.truncf %126 : vector<8x128xf32> to vector<8x128xbf16>
    %cst_44 = arith.constant dense<0.000000e+00> : vector<8x512xf32>
    %140 = tpu.matmul %139, %10, %cst_44 {dimension_numbers = #tpu.dot_dimension_numbers<[1], [0], [0], [1], [0, 0, 1, 1], [], []>} : vector<8x128xbf16>, vector<128x512xbf16>, vector<8x512xf32> -> vector<8x512xf32>
    %141 = arith.addf %138, %140 : vector<8x512xf32>
    %142 = vector.extract_strided_slice %141 {offsets = [0, 0], sizes = [8, 128], strides = [1, 1]} : vector<8x512xf32> to vector<8x128xf32>
    %143 = arith.negf %142 : vector<8x128xf32>
    %144 = math.exp %143 : vector<8x128xf32>
    %cst_45 = arith.constant 1.000000e+00 : f32
    %145 = vector.broadcast %cst_45 : f32 to vector<8x128xf32>
    %146 = arith.addf %145, %144 : vector<8x128xf32>
    %147 = arith.divf %145, %146 : vector<8x128xf32>
    %148 = vector.extract_strided_slice %141 {offsets = [0, 128], sizes = [8, 128], strides = [1, 1]} : vector<8x512xf32> to vector<8x128xf32>
    %149 = arith.negf %148 : vector<8x128xf32>
    %150 = math.exp %149 : vector<8x128xf32>
    %cst_46 = arith.constant 1.000000e+00 : f32
    %151 = vector.broadcast %cst_46 : f32 to vector<8x128xf32>
    %152 = arith.addf %151, %150 : vector<8x128xf32>
    %153 = arith.divf %151, %152 : vector<8x128xf32>
    %154 = vector.extract_strided_slice %141 {offsets = [0, 256], sizes = [8, 128], strides = [1, 1]} : vector<8x512xf32> to vector<8x128xf32>
    %155 = math.tanh %154 : vector<8x128xf32>
    %156 = vector.extract_strided_slice %141 {offsets = [0, 384], sizes = [8, 128], strides = [1, 1]} : vector<8x512xf32> to vector<8x128xf32>
    %157 = arith.negf %156 : vector<8x128xf32>
    %158 = math.exp %157 : vector<8x128xf32>
    %cst_47 = arith.constant 1.000000e+00 : f32
    %159 = vector.broadcast %cst_47 : f32 to vector<8x128xf32>
    %160 = arith.addf %159, %158 : vector<8x128xf32>
    %161 = arith.divf %159, %160 : vector<8x128xf32>
    %162 = arith.mulf %153, %124 : vector<8x128xf32>
    %163 = arith.mulf %147, %155 : vector<8x128xf32>
    %164 = arith.addf %162, %163 : vector<8x128xf32>
    %165 = math.tanh %164 : vector<8x128xf32>
    %166 = arith.mulf %161, %165 : vector<8x128xf32>
    %167 = vector.broadcast %11 : vector<1x128xf32> to vector<8x128xf32>
    %168 = arith.mulf %166, %167 : vector<8x128xf32>
    %cst_48 = arith.constant dense<0.000000e+00> : vector<8xf32>
    %169 = vector.multi_reduction <add>, %168, %cst_48 [1] : vector<8x128xf32> to vector<8xf32>
    %170 = vector.shape_cast %169 : vector<8xf32> to vector<8x1xf32>
    %171 = vector.broadcast %12 : vector<1x1xf32> to vector<8x1xf32>
    %172 = arith.addf %170, %171 : vector<8x1xf32>
    %173 = arith.index_cast %136 : i32 to index
    %c0_49 = arith.constant 0 : index
    %174 = vector.load %arg7[%173, %c0_49] : memref<64x1xf32, #tpu.memory_space<vmem>>, vector<8x1xf32>
    tpu.vector_store %arg7[%173, %c0_49], %172 {strides = array<i32>} : memref<64x1xf32, #tpu.memory_space<vmem>>, vector<8x1xf32>,
    %c4_i32 = arith.constant 4 : i32
    %c8_i32_50 = arith.constant 8 : i32
    %175 = arith.muli %c4_i32, %c8_i32_50 : i32
    %176 = tpu.assume_multiple %175, 8 : i32
    %177 = arith.index_cast %176 : i32 to index
    %c0_51 = arith.constant 0 : index
    %178 = vector.load %arg8[%177, %c0_51] : memref<64x512xf32, #tpu.memory_space<vmem>>, vector<8x512xf32>
    %179 = arith.truncf %166 : vector<8x128xf32> to vector<8x128xbf16>
    %cst_52 = arith.constant dense<0.000000e+00> : vector<8x512xf32>
    %180 = tpu.matmul %179, %10, %cst_52 {dimension_numbers = #tpu.dot_dimension_numbers<[1], [0], [0], [1], [0, 0, 1, 1], [], []>} : vector<8x128xbf16>, vector<128x512xbf16>, vector<8x512xf32> -> vector<8x512xf32>
    %181 = arith.addf %178, %180 : vector<8x512xf32>
    %182 = vector.extract_strided_slice %181 {offsets = [0, 0], sizes = [8, 128], strides = [1, 1]} : vector<8x512xf32> to vector<8x128xf32>
    %183 = arith.negf %182 : vector<8x128xf32>
    %184 = math.exp %183 : vector<8x128xf32>
    %cst_53 = arith.constant 1.000000e+00 : f32
    %185 = vector.broadcast %cst_53 : f32 to vector<8x128xf32>
    %186 = arith.addf %185, %184 : vector<8x128xf32>
    %187 = arith.divf %185, %186 : vector<8x128xf32>
    %188 = vector.extract_strided_slice %181 {offsets = [0, 128], sizes = [8, 128], strides = [1, 1]} : vector<8x512xf32> to vector<8x128xf32>
    %189 = arith.negf %188 : vector<8x128xf32>
    %190 = math.exp %189 : vector<8x128xf32>
    %cst_54 = arith.constant 1.000000e+00 : f32
    %191 = vector.broadcast %cst_54 : f32 to vector<8x128xf32>
    %192 = arith.addf %191, %190 : vector<8x128xf32>
    %193 = arith.divf %191, %192 : vector<8x128xf32>
    %194 = vector.extract_strided_slice %181 {offsets = [0, 256], sizes = [8, 128], strides = [1, 1]} : vector<8x512xf32> to vector<8x128xf32>
    %195 = math.tanh %194 : vector<8x128xf32>
    %196 = vector.extract_strided_slice %181 {offsets = [0, 384], sizes = [8, 128], strides = [1, 1]} : vector<8x512xf32> to vector<8x128xf32>
    %197 = arith.negf %196 : vector<8x128xf32>
    %198 = math.exp %197 : vector<8x128xf32>
    %cst_55 = arith.constant 1.000000e+00 : f32
    %199 = vector.broadcast %cst_55 : f32 to vector<8x128xf32>
    %200 = arith.addf %199, %198 : vector<8x128xf32>
    %201 = arith.divf %199, %200 : vector<8x128xf32>
    %202 = arith.mulf %193, %164 : vector<8x128xf32>
    %203 = arith.mulf %187, %195 : vector<8x128xf32>
    %204 = arith.addf %202, %203 : vector<8x128xf32>
    %205 = math.tanh %204 : vector<8x128xf32>
    %206 = arith.mulf %201, %205 : vector<8x128xf32>
    %207 = vector.broadcast %11 : vector<1x128xf32> to vector<8x128xf32>
    %208 = arith.mulf %206, %207 : vector<8x128xf32>
    %cst_56 = arith.constant dense<0.000000e+00> : vector<8xf32>
    %209 = vector.multi_reduction <add>, %208, %cst_56 [1] : vector<8x128xf32> to vector<8xf32>
    %210 = vector.shape_cast %209 : vector<8xf32> to vector<8x1xf32>
    %211 = vector.broadcast %12 : vector<1x1xf32> to vector<8x1xf32>
    %212 = arith.addf %210, %211 : vector<8x1xf32>
    %213 = arith.index_cast %176 : i32 to index
    %c0_57 = arith.constant 0 : index
    %214 = vector.load %arg7[%213, %c0_57] : memref<64x1xf32, #tpu.memory_space<vmem>>, vector<8x1xf32>
    tpu.vector_store %arg7[%213, %c0_57], %212 {strides = array<i32>} : memref<64x1xf32, #tpu.memory_space<vmem>>, vector<8x1xf32>,
    %c5_i32 = arith.constant 5 : i32
    %c8_i32_58 = arith.constant 8 : i32
    %215 = arith.muli %c5_i32, %c8_i32_58 : i32
    %216 = tpu.assume_multiple %215, 8 : i32
    %217 = arith.index_cast %216 : i32 to index
    %c0_59 = arith.constant 0 : index
    %218 = vector.load %arg8[%217, %c0_59] : memref<64x512xf32, #tpu.memory_space<vmem>>, vector<8x512xf32>
    %219 = arith.truncf %206 : vector<8x128xf32> to vector<8x128xbf16>
    %cst_60 = arith.constant dense<0.000000e+00> : vector<8x512xf32>
    %220 = tpu.matmul %219, %10, %cst_60 {dimension_numbers = #tpu.dot_dimension_numbers<[1], [0], [0], [1], [0, 0, 1, 1], [], []>} : vector<8x128xbf16>, vector<128x512xbf16>, vector<8x512xf32> -> vector<8x512xf32>
    %221 = arith.addf %218, %220 : vector<8x512xf32>
    %222 = vector.extract_strided_slice %221 {offsets = [0, 0], sizes = [8, 128], strides = [1, 1]} : vector<8x512xf32> to vector<8x128xf32>
    %223 = arith.negf %222 : vector<8x128xf32>
    %224 = math.exp %223 : vector<8x128xf32>
    %cst_61 = arith.constant 1.000000e+00 : f32
    %225 = vector.broadcast %cst_61 : f32 to vector<8x128xf32>
    %226 = arith.addf %225, %224 : vector<8x128xf32>
    %227 = arith.divf %225, %226 : vector<8x128xf32>
    %228 = vector.extract_strided_slice %221 {offsets = [0, 128], sizes = [8, 128], strides = [1, 1]} : vector<8x512xf32> to vector<8x128xf32>
    %229 = arith.negf %228 : vector<8x128xf32>
    %230 = math.exp %229 : vector<8x128xf32>
    %cst_62 = arith.constant 1.000000e+00 : f32
    %231 = vector.broadcast %cst_62 : f32 to vector<8x128xf32>
    %232 = arith.addf %231, %230 : vector<8x128xf32>
    %233 = arith.divf %231, %232 : vector<8x128xf32>
    %234 = vector.extract_strided_slice %221 {offsets = [0, 256], sizes = [8, 128], strides = [1, 1]} : vector<8x512xf32> to vector<8x128xf32>
    %235 = math.tanh %234 : vector<8x128xf32>
    %236 = vector.extract_strided_slice %221 {offsets = [0, 384], sizes = [8, 128], strides = [1, 1]} : vector<8x512xf32> to vector<8x128xf32>
    %237 = arith.negf %236 : vector<8x128xf32>
    %238 = math.exp %237 : vector<8x128xf32>
    %cst_63 = arith.constant 1.000000e+00 : f32
    %239 = vector.broadcast %cst_63 : f32 to vector<8x128xf32>
    %240 = arith.addf %239, %238 : vector<8x128xf32>
    %241 = arith.divf %239, %240 : vector<8x128xf32>
    %242 = arith.mulf %233, %204 : vector<8x128xf32>
    %243 = arith.mulf %227, %235 : vector<8x128xf32>
    %244 = arith.addf %242, %243 : vector<8x128xf32>
    %245 = math.tanh %244 : vector<8x128xf32>
    %246 = arith.mulf %241, %245 : vector<8x128xf32>
    %247 = vector.broadcast %11 : vector<1x128xf32> to vector<8x128xf32>
    %248 = arith.mulf %246, %247 : vector<8x128xf32>
    %cst_64 = arith.constant dense<0.000000e+00> : vector<8xf32>
    %249 = vector.multi_reduction <add>, %248, %cst_64 [1] : vector<8x128xf32> to vector<8xf32>
    %250 = vector.shape_cast %249 : vector<8xf32> to vector<8x1xf32>
    %251 = vector.broadcast %12 : vector<1x1xf32> to vector<8x1xf32>
    %252 = arith.addf %250, %251 : vector<8x1xf32>
    %253 = arith.index_cast %216 : i32 to index
    %c0_65 = arith.constant 0 : index
    %254 = vector.load %arg7[%253, %c0_65] : memref<64x1xf32, #tpu.memory_space<vmem>>, vector<8x1xf32>
    tpu.vector_store %arg7[%253, %c0_65], %252 {strides = array<i32>} : memref<64x1xf32, #tpu.memory_space<vmem>>, vector<8x1xf32>,
    %c6_i32 = arith.constant 6 : i32
    %c8_i32_66 = arith.constant 8 : i32
    %255 = arith.muli %c6_i32, %c8_i32_66 : i32
    %256 = tpu.assume_multiple %255, 8 : i32
    %257 = arith.index_cast %256 : i32 to index
    %c0_67 = arith.constant 0 : index
    %258 = vector.load %arg8[%257, %c0_67] : memref<64x512xf32, #tpu.memory_space<vmem>>, vector<8x512xf32>
    %259 = arith.truncf %246 : vector<8x128xf32> to vector<8x128xbf16>
    %cst_68 = arith.constant dense<0.000000e+00> : vector<8x512xf32>
    %260 = tpu.matmul %259, %10, %cst_68 {dimension_numbers = #tpu.dot_dimension_numbers<[1], [0], [0], [1], [0, 0, 1, 1], [], []>} : vector<8x128xbf16>, vector<128x512xbf16>, vector<8x512xf32> -> vector<8x512xf32>
    %261 = arith.addf %258, %260 : vector<8x512xf32>
    %262 = vector.extract_strided_slice %261 {offsets = [0, 0], sizes = [8, 128], strides = [1, 1]} : vector<8x512xf32> to vector<8x128xf32>
    %263 = arith.negf %262 : vector<8x128xf32>
    %264 = math.exp %263 : vector<8x128xf32>
    %cst_69 = arith.constant 1.000000e+00 : f32
    %265 = vector.broadcast %cst_69 : f32 to vector<8x128xf32>
    %266 = arith.addf %265, %264 : vector<8x128xf32>
    %267 = arith.divf %265, %266 : vector<8x128xf32>
    %268 = vector.extract_strided_slice %261 {offsets = [0, 128], sizes = [8, 128], strides = [1, 1]} : vector<8x512xf32> to vector<8x128xf32>
    %269 = arith.negf %268 : vector<8x128xf32>
    %270 = math.exp %269 : vector<8x128xf32>
    %cst_70 = arith.constant 1.000000e+00 : f32
    %271 = vector.broadcast %cst_70 : f32 to vector<8x128xf32>
    %272 = arith.addf %271, %270 : vector<8x128xf32>
    %273 = arith.divf %271, %272 : vector<8x128xf32>
    %274 = vector.extract_strided_slice %261 {offsets = [0, 256], sizes = [8, 128], strides = [1, 1]} : vector<8x512xf32> to vector<8x128xf32>
    %275 = math.tanh %274 : vector<8x128xf32>
    %276 = vector.extract_strided_slice %261 {offsets = [0, 384], sizes = [8, 128], strides = [1, 1]} : vector<8x512xf32> to vector<8x128xf32>
    %277 = arith.negf %276 : vector<8x128xf32>
    %278 = math.exp %277 : vector<8x128xf32>
    %cst_71 = arith.constant 1.000000e+00 : f32
    %279 = vector.broadcast %cst_71 : f32 to vector<8x128xf32>
    %280 = arith.addf %279, %278 : vector<8x128xf32>
    %281 = arith.divf %279, %280 : vector<8x128xf32>
    %282 = arith.mulf %273, %244 : vector<8x128xf32>
    %283 = arith.mulf %267, %275 : vector<8x128xf32>
    %284 = arith.addf %282, %283 : vector<8x128xf32>
    %285 = math.tanh %284 : vector<8x128xf32>
    %286 = arith.mulf %281, %285 : vector<8x128xf32>
    %287 = vector.broadcast %11 : vector<1x128xf32> to vector<8x128xf32>
    %288 = arith.mulf %286, %287 : vector<8x128xf32>
    %cst_72 = arith.constant dense<0.000000e+00> : vector<8xf32>
    %289 = vector.multi_reduction <add>, %288, %cst_72 [1] : vector<8x128xf32> to vector<8xf32>
    %290 = vector.shape_cast %289 : vector<8xf32> to vector<8x1xf32>
    %291 = vector.broadcast %12 : vector<1x1xf32> to vector<8x1xf32>
    %292 = arith.addf %290, %291 : vector<8x1xf32>
    %293 = arith.index_cast %256 : i32 to index
    %c0_73 = arith.constant 0 : index
    %294 = vector.load %arg7[%293, %c0_73] : memref<64x1xf32, #tpu.memory_space<vmem>>, vector<8x1xf32>
    tpu.vector_store %arg7[%293, %c0_73], %292 {strides = array<i32>} : memref<64x1xf32, #tpu.memory_space<vmem>>, vector<8x1xf32>,
    %c7_i32 = arith.constant 7 : i32
    %c8_i32_74 = arith.constant 8 : i32
    %295 = arith.muli %c7_i32, %c8_i32_74 : i32
    %296 = tpu.assume_multiple %295, 8 : i32
    %297 = arith.index_cast %296 : i32 to index
    %c0_75 = arith.constant 0 : index
    %298 = vector.load %arg8[%297, %c0_75] : memref<64x512xf32, #tpu.memory_space<vmem>>, vector<8x512xf32>
    %299 = arith.truncf %286 : vector<8x128xf32> to vector<8x128xbf16>
    %cst_76 = arith.constant dense<0.000000e+00> : vector<8x512xf32>
    %300 = tpu.matmul %299, %10, %cst_76 {dimension_numbers = #tpu.dot_dimension_numbers<[1], [0], [0], [1], [0, 0, 1, 1], [], []>} : vector<8x128xbf16>, vector<128x512xbf16>, vector<8x512xf32> -> vector<8x512xf32>
    %301 = arith.addf %298, %300 : vector<8x512xf32>
    %302 = vector.extract_strided_slice %301 {offsets = [0, 0], sizes = [8, 128], strides = [1, 1]} : vector<8x512xf32> to vector<8x128xf32>
    %303 = arith.negf %302 : vector<8x128xf32>
    %304 = math.exp %303 : vector<8x128xf32>
    %cst_77 = arith.constant 1.000000e+00 : f32
    %305 = vector.broadcast %cst_77 : f32 to vector<8x128xf32>
    %306 = arith.addf %305, %304 : vector<8x128xf32>
    %307 = arith.divf %305, %306 : vector<8x128xf32>
    %308 = vector.extract_strided_slice %301 {offsets = [0, 128], sizes = [8, 128], strides = [1, 1]} : vector<8x512xf32> to vector<8x128xf32>
    %309 = arith.negf %308 : vector<8x128xf32>
    %310 = math.exp %309 : vector<8x128xf32>
    %cst_78 = arith.constant 1.000000e+00 : f32
    %311 = vector.broadcast %cst_78 : f32 to vector<8x128xf32>
    %312 = arith.addf %311, %310 : vector<8x128xf32>
    %313 = arith.divf %311, %312 : vector<8x128xf32>
    %314 = vector.extract_strided_slice %301 {offsets = [0, 256], sizes = [8, 128], strides = [1, 1]} : vector<8x512xf32> to vector<8x128xf32>
    %315 = math.tanh %314 : vector<8x128xf32>
    %316 = vector.extract_strided_slice %301 {offsets = [0, 384], sizes = [8, 128], strides = [1, 1]} : vector<8x512xf32> to vector<8x128xf32>
    %317 = arith.negf %316 : vector<8x128xf32>
    %318 = math.exp %317 : vector<8x128xf32>
    %cst_79 = arith.constant 1.000000e+00 : f32
    %319 = vector.broadcast %cst_79 : f32 to vector<8x128xf32>
    %320 = arith.addf %319, %318 : vector<8x128xf32>
    %321 = arith.divf %319, %320 : vector<8x128xf32>
    %322 = arith.mulf %313, %284 : vector<8x128xf32>
    %323 = arith.mulf %307, %315 : vector<8x128xf32>
    %324 = arith.addf %322, %323 : vector<8x128xf32>
    %325 = math.tanh %324 : vector<8x128xf32>
    %326 = arith.mulf %321, %325 : vector<8x128xf32>
    %327 = vector.broadcast %11 : vector<1x128xf32> to vector<8x128xf32>
    %328 = arith.mulf %326, %327 : vector<8x128xf32>
    %cst_80 = arith.constant dense<0.000000e+00> : vector<8xf32>
    %329 = vector.multi_reduction <add>, %328, %cst_80 [1] : vector<8x128xf32> to vector<8xf32>
    %330 = vector.shape_cast %329 : vector<8xf32> to vector<8x1xf32>
    %331 = vector.broadcast %12 : vector<1x1xf32> to vector<8x1xf32>
    %332 = arith.addf %330, %331 : vector<8x1xf32>
    %333 = arith.index_cast %296 : i32 to index
    %c0_81 = arith.constant 0 : index
    %334 = vector.load %arg7[%333, %c0_81] : memref<64x1xf32, #tpu.memory_space<vmem>>, vector<8x1xf32>
    tpu.vector_store %arg7[%333, %c0_81], %332 {strides = array<i32>} : memref<64x1xf32, #tpu.memory_space<vmem>>, vector<8x1xf32>,
    %c8_i32_82 = arith.constant 8 : i32
    %c0_83 = arith.constant 0 : index
    %c0_84 = arith.constant 0 : index
    %335 = vector.load %arg9[%c0_83, %c0_84] : memref<8x128xf32, #tpu.memory_space<vmem>>, vector<8x128xf32>
    tpu.vector_store %arg9[%c0_83, %c0_84], %326 {strides = array<i32>} : memref<8x128xf32, #tpu.memory_space<vmem>>, vector<8x128xf32>,
    %c0_85 = arith.constant 0 : index
    %c0_86 = arith.constant 0 : index
    %336 = vector.load %arg10[%c0_85, %c0_86] : memref<8x128xf32, #tpu.memory_space<vmem>>, vector<8x128xf32>
    tpu.vector_store %arg10[%c0_85, %c0_86], %324 {strides = array<i32>} : memref<8x128xf32, #tpu.memory_space<vmem>>, vector<8x128xf32>,
    return
  }
  func.func @transform_0(%arg0: i32) -> (i32, i32) {
    %c0_i32 = arith.constant 0 : i32
    %c0_i32_0 = arith.constant 0 : i32
    return %arg0, %c0_i32 : i32, i32
  }
  func.func @transform_1(%arg0: i32) -> (i32, i32) {
    %c0_i32 = arith.constant 0 : i32
    %c0_i32_0 = arith.constant 0 : i32
    %c0_i32_1 = arith.constant 0 : i32
    return %c0_i32, %c0_i32_0 : i32, i32
  }
  func.func @transform_2(%arg0: i32) -> (i32, i32) {
    %c0_i32 = arith.constant 0 : i32
    %c0_i32_0 = arith.constant 0 : i32
    %c0_i32_1 = arith.constant 0 : i32
    return %c0_i32, %c0_i32_0 : i32, i32
  }
  func.func @transform_3(%arg0: i32) -> (i32, i32) {
    %c0_i32 = arith.constant 0 : i32
    %c0_i32_0 = arith.constant 0 : i32
    %c0_i32_1 = arith.constant 0 : i32
    return %c0_i32, %c0_i32_0 : i32, i32
  }
  func.func @transform_4(%arg0: i32) -> (i32, i32) {
    %c0_i32 = arith.constant 0 : i32
    %c0_i32_0 = arith.constant 0 : i32
    %c0_i32_1 = arith.constant 0 : i32
    return %c0_i32, %c0_i32_0 : i32, i32
  }
  func.func @transform_5(%arg0: i32) -> (i32, i32) {
    %c0_i32 = arith.constant 0 : i32
    %c0_i32_0 = arith.constant 0 : i32
    %c0_i32_1 = arith.constant 0 : i32
    return %c0_i32, %c0_i32_0 : i32, i32
  }
  func.func @transform_6(%arg0: i32) -> (i32, i32) {
    %c0_i32 = arith.constant 0 : i32
    %c0_i32_0 = arith.constant 0 : i32
    return %arg0, %c0_i32 : i32, i32
  }
}

</mosaic_0001>

<llo_original>
// kernel: async_naive_forward.1
$region0: #{async_naive_forward.1}
  #allocation0 [shape = 'u32[]', space=smem, size = 0x4, offset = 0x4, fixed_abs, tag = 'smem constant byte address 0x4 - core index']
  #allocation1 [shape = 'u32[144,128]{1,0:T(1,128)}', space=vmem, size = 0x12000, scoped, tag = 'internal scratch']
  #allocation2 [shape = 'f32[64,512]{1,0:T(8,128)}', space=vmem, size = 0x20000, scoped, tag = 'scratch operand']
  #allocation3 [shape = 'f32[8,128]{1,0:T(8,128)}', space=vmem, size = 0x1000, scoped, tag = 'scratch operand']
  #allocation4 [shape = 'f32[8,128]{1,0:T(8,128)}', space=vmem, size = 0x1000, scoped, tag = 'scratch operand']
  #allocation5 [shape = 'f32[1,1]{1,0:T(1,128)S(1)}', space=vmem, size = 0x200, scoped, tag = 'scoped memory for async_naive_forward.1']
  %s0 = inlined_call_operand.vmem [shape: bf16[64,32], index: 0, kind: input, shape index: {}]
  %s1 = inlined_call_operand.vmem [shape: bf16[32,512], index: 1, kind: input, shape index: {}]
  %s2 = inlined_call_operand.vmem [shape: bf16[128,512], index: 2, kind: input, shape index: {}]
  %s3 = inlined_call_operand.vmem [shape: f32[1,512], index: 3, kind: input, shape index: {}]
  %s4 = inlined_call_operand.vmem [shape: f32[1,128], index: 4, kind: input, shape index: {}]
  %s5 = inlined_call_operand.<no memory space> [shape: f32[1,1], index: 5, kind: input, shape index: {}]
  %s6 = inlined_call_operand.vmem [shape: f32[64,1], index: 6, kind: output, shape index: {}]
  %s7 = sld [smem:[#allocation0]]
  $region38: #{async_naive_forward.1} parent=0
    _
  %s9 = ssub.s32 1, %s7
  %s10 = scalar_select 0, %s9, %s7
  %v11 = vstv %s5
  %12 = vst [vmem:[#allocation5] sm:$0x1] %v11
  // Predicated region
  $region2: #{async_naive_forward.1} parent=0 // pred_check
    _
  $region3: #{async_naive_forward.1} parent=0 // pred_check_branch
    %14 = sbr.rel (0) target = $region5
  $region4: #{async_naive_forward.1} parent=0 // pred_region
    _
  $region5: #{async_naive_forward.1} parent=0 // pred_fallthru
    _
  // Predicated region
  $region6: #{async_naive_forward.1} parent=0 // pred_check
    _
  $region7: #{async_naive_forward.1} parent=0 // pred_check_branch
    %16 = sbr.rel (0) target = $region9
  $region8: #{async_naive_forward.1} parent=0 // pred_region
    _
  $region9: #{async_naive_forward.1} parent=0 // pred_fallthru
    _
  // Predicated region
  $region10: #{async_naive_forward.1} parent=0 // pred_check
    _
  $region11: #{async_naive_forward.1} parent=0 // pred_check_branch
    %18 = sbr.rel (0) target = $region13
  $region12: #{async_naive_forward.1} parent=0 // pred_region
    _
  $region13: #{async_naive_forward.1} parent=0 // pred_fallthru
    _
  // Predicated region
  $region14: #{async_naive_forward.1} parent=0 // pred_check
    _
  $region15: #{async_naive_forward.1} parent=0 // pred_check_branch
    %20 = sbr.rel (0) target = $region17
  $region16: #{async_naive_forward.1} parent=0 // pred_region
    _
  $region17: #{async_naive_forward.1} parent=0 // pred_fallthru
    _
  // Predicated region
  $region18: #{async_naive_forward.1} parent=0 // pred_check
    _
  $region19: #{async_naive_forward.1} parent=0 // pred_check_branch
    %22 = sbr.rel (0) target = $region21
  $region20: #{async_naive_forward.1} parent=0 // pred_region
    _
  $region21: #{async_naive_forward.1} parent=0 // pred_fallthru
    _
  // Predicated region
  $region22: #{async_naive_forward.1} parent=0 // pred_check
    _
  $region23: #{async_naive_forward.1} parent=0 // pred_check_branch
    %24 = sbr.rel (0) target = $region25
  $region24: #{async_naive_forward.1} parent=0 // pred_region
    _
  $region25: #{async_naive_forward.1} parent=0 // pred_fallthru
    _
  %p26 = scmp.eq.s32.totalorder 0, 0
  // Predicated region
  $region26: #{async_naive_forward.1} parent=0 // pred_check
    %p27 = pneg %p26
  $region27: #{async_naive_forward.1} parent=0 // pred_check_branch
    %29 = sbr.rel (%p27) target = $region29
  $region28: #{async_naive_forward.1} parent=0 // pred_region
    %30 = vst [vmem:[#allocation3] sm:$0xff] 0.0
    %31 = vst [vmem:[#allocation4] sm:$0xff] 0.0
  $region29: #{async_naive_forward.1} parent=0 // pred_fallthru
    _
  %v32 = vld [vmem:[%s0] sm:$0xf]
  %v33 = vld [vmem:[%s0 + $0x4] sm:$0xf]
  %v34 = vld [vmem:[%s0 + $0x8] sm:$0xf]
  %v35 = vld [vmem:[%s0 + $0xc] sm:$0xf]
  %v36 = vld [vmem:[%s0 + $0x10] sm:$0xf]
  %v37 = vld [vmem:[%s0 + $0x14] sm:$0xf]
  %v38 = vld [vmem:[%s0 + $0x18] sm:$0xf]
  %v39 = vld [vmem:[%s0 + $0x1c] sm:$0xf]
  %v40 = vld [vmem:[%s1] sm:$0xff]
  %v41 = vld [vmem:[%s1 + $0x8] sm:$0xff]
  %v42 = vld [vmem:[%s1 + $0x10] sm:$0xff]
  %v43 = vld [vmem:[%s1 + $0x18] sm:$0xff]
  %v44 = vld [vmem:[%s1 + $0x20] sm:$0xff]
  %v45 = vld [vmem:[%s1 + $0x28] sm:$0xff]
  %v46 = vld [vmem:[%s1 + $0x30] sm:$0xff]
  %v47 = vld [vmem:[%s1 + $0x38] sm:$0xff]
  %v48 = vld [vmem:[%s3] sm:$0xf]
  %v50 = vlaneseq
  %v51 = vshrl.u32 %v50, 7
  %v52 = vsub.s32 0, %v51
  %v53 = vrot.slane %v48, %v52
  %v54 = vlaneseq
  %v55 = vshrl.u32 %v54, 7
  %v56 = vsub.s32 1, %v55
  %v57 = vrot.slane %v48, %v56
  %v58 = vlaneseq
  %v59 = vshrl.u32 %v58, 7
  %v60 = vsub.s32 2, %v59
  %v61 = vrot.slane %v48, %v60
  %v62 = vlaneseq
  %v63 = vshrl.u32 %v62, 7
  %v64 = vsub.s32 3, %v63
  %v65 = vrot.slane %v48, %v64
  %v78 = vunpack.c.l.b16 %v32
  %v79 = vunpack.c.l.b16 %v33
  %v80 = vunpack.c.l.b16 %v34
  %v81 = vunpack.c.l.b16 %v35
  %v82 = vunpack.c.l.b16 %v36
  %v83 = vunpack.c.l.b16 %v37
  %v84 = vunpack.c.l.b16 %v38
  %v85 = vunpack.c.l.b16 %v39
  %v86 = vpack.c.b16 %v79, %v78
  %v87 = vpack.c.b16 %v81, %v80
  %v88 = vpack.c.b16 %v83, %v82
  %v89 = vpack.c.b16 %v85, %v84
  %v98 = vunpack.c.l.b16 %v40
  %v99 = vunpack.c.h.b16 %v40
  %v100 = vunpack.c.l.b16 %v41
  %v101 = vunpack.c.h.b16 %v41
  %v102 = vunpack.c.l.b16 %v42
  %v103 = vunpack.c.h.b16 %v42
  %v104 = vunpack.c.l.b16 %v43
  %v105 = vunpack.c.h.b16 %v43
  %v106 = vunpack.c.l.b16 %v44
  %v107 = vunpack.c.h.b16 %v44
  %v108 = vunpack.c.l.b16 %v45
  %v109 = vunpack.c.h.b16 %v45
  %v110 = vunpack.c.l.b16 %v46
  %v111 = vunpack.c.h.b16 %v46
  %v112 = vunpack.c.l.b16 %v47
  %v113 = vunpack.c.h.b16 %v47
  %v114 = vpack.c.b16 %v102, %v98
  %v115 = vpack.c.b16 %v103, %v99
  %v116 = vpack.c.b16 %v104, %v100
  %v117 = vpack.c.b16 %v105, %v101
  %v118 = vpack.c.b16 %v110, %v106
  %v119 = vpack.c.b16 %v111, %v107
  %v120 = vpack.c.b16 %v112, %v108
  %v121 = vpack.c.b16 %v113, %v109
  %vm130 = vcmask 261120
  %v132 = vsel %vm130, %v86, 0
  %v135 = vsel %vm130, %v87, 0
  %v138 = vsel %vm130, %v88, 0
  %v141 = vsel %vm130, %v89, 0
  %143 = vmatprep.subr.bf16.mxu0 %v115
  %144 = vmatpush1.bf16.msra.mxu0 %v114
  %145 = vmatprep.subr.bf16.mxu0 %v119
  %146 = vmatpush1.bf16.msra.mxu0 %v118
  %147 = vmatprep.subr.bf16.mxu0 0
  %148 = vmatpush1.bf16.msra.mxu0 0
  %149 = vmatprep.subr.bf16.mxu0 0
  %150 = vmatpush1.bf16.msra.mxu0 0
  %151 = vmatprep.subr.bf16.mxu0 0
  %152 = vmatpush1.bf16.msra.mxu0 0
  %153 = vmatprep.subr.bf16.mxu0 0
  %154 = vmatpush1.bf16.msra.mxu0 0
  %155 = vmatprep.subr.bf16.mxu0 0
  %156 = vmatpush1.bf16.msra.mxu0 0
  %157 = vmatprep.subr.bf16.mxu0 0
  %158 = vmatpush1.bf16.msra.mxu0 0
  %159 = vmatprep.subr.bf16.mxu0 0
  %160 = vmatpush1.bf16.msra.mxu0 0
  %161 = vmatprep.subr.bf16.mxu0 0
  %162 = vmatpush1.bf16.msra.mxu0 0
  %163 = vmatprep.subr.bf16.mxu0 0
  %164 = vmatpush1.bf16.msra.mxu0 0
  %165 = vmatprep.subr.bf16.mxu0 0
  %166 = vmatpush1.bf16.msra.mxu0 0
  %167 = vmatprep.subr.bf16.mxu0 0
  %168 = vmatpush1.bf16.msra.mxu0 0
  %169 = vmatprep.subr.bf16.mxu0 0
  %170 = vmatpush1.bf16.msra.mxu0 0
  %171 = vmatprep.subr.bf16.mxu0 0
  %172 = vmatpush1.bf16.msra.mxu0 0
  %173 = vmatprep.subr.bf16.mxu0 0
  %174 = vmatpush1.bf16.msra.mxu0 0
  %175 = vmatprep.mubr.bf16.mxu0 0
  %176 = vmatmul.mubr.bf16.gmra.mrb[0].mxu0 %v132
  %v177 = vpop.f32.mrb[0].mxu0
  %v178 = vadd.f32 %v53, %v177
  %v179 = vpop.f32.mrb[0].mxu0
  %v180 = vadd.f32 %v57, %v179
  %v181 = vpop.f32.mrb[0].mxu0
  %v182 = vadd.f32 %v53, %v181
  %v183 = vpop.f32.mrb[0].mxu0
  %v184 = vadd.f32 %v57, %v183
  %185 = vmatprep.mubr.bf16.mxu0 0
  %186 = vmatmul.mubr.bf16.gmra.mrb[0].mxu0 %v135
  %v187 = vpop.f32.mrb[0].mxu0
  %v188 = vadd.f32 %v53, %v187
  %v189 = vpop.f32.mrb[0].mxu0
  %v190 = vadd.f32 %v57, %v189
  %v191 = vpop.f32.mrb[0].mxu0
  %v192 = vadd.f32 %v53, %v191
  %v193 = vpop.f32.mrb[0].mxu0
  %v194 = vadd.f32 %v57, %v193
  %195 = vmatprep.mubr.bf16.mxu0 0
  %196 = vmatmul.mubr.bf16.gmra.mrb[0].mxu0 %v138
  %v197 = vpop.f32.mrb[0].mxu0
  %v198 = vadd.f32 %v53, %v197
  %v199 = vpop.f32.mrb[0].mxu0
  %v200 = vadd.f32 %v57, %v199
  %v201 = vpop.f32.mrb[0].mxu0
  %v202 = vadd.f32 %v53, %v201
  %v203 = vpop.f32.mrb[0].mxu0
  %v204 = vadd.f32 %v57, %v203
  %205 = vmatprep.mubr.bf16.mxu0 0
  %206 = vmatmul.mubr.bf16.gmra.mrb[0].mxu0 %v141
  %v207 = vpop.f32.mrb[0].mxu0
  %v208 = vadd.f32 %v53, %v207
  %v209 = vpop.f32.mrb[0].mxu0
  %v210 = vadd.f32 %v57, %v209
  %v211 = vpop.f32.mrb[0].mxu0
  %v212 = vadd.f32 %v53, %v211
  %v213 = vpop.f32.mrb[0].mxu0
  %v214 = vadd.f32 %v57, %v213
  %215 = vdwg.mxu0
  %216 = vmatprep.subr.bf16.mxu0 %v117
  %217 = vmatpush1.bf16.msra.mxu0 %v116
  %218 = vmatprep.subr.bf16.mxu0 %v121
  %219 = vmatpush1.bf16.msra.mxu0 %v120
  %220 = vmatprep.subr.bf16.mxu0 0
  %221 = vmatpush1.bf16.msra.mxu0 0
  %222 = vmatprep.subr.bf16.mxu0 0
  %223 = vmatpush1.bf16.msra.mxu0 0
  %224 = vmatprep.subr.bf16.mxu0 0
  %225 = vmatpush1.bf16.msra.mxu0 0
  %226 = vmatprep.subr.bf16.mxu0 0
  %227 = vmatpush1.bf16.msra.mxu0 0
  %228 = vmatprep.subr.bf16.mxu0 0
  %229 = vmatpush1.bf16.msra.mxu0 0
  %230 = vmatprep.subr.bf16.mxu0 0
  %231 = vmatpush1.bf16.msra.mxu0 0
  %232 = vmatprep.subr.bf16.mxu0 0
  %233 = vmatpush1.bf16.msra.mxu0 0
  %234 = vmatprep.subr.bf16.mxu0 0
  %235 = vmatpush1.bf16.msra.mxu0 0
  %236 = vmatprep.subr.bf16.mxu0 0
  %237 = vmatpush1.bf16.msra.mxu0 0
  %238 = vmatprep.subr.bf16.mxu0 0
  %239 = vmatpush1.bf16.msra.mxu0 0
  %240 = vmatprep.subr.bf16.mxu0 0
  %241 = vmatpush1.bf16.msra.mxu0 0
  %242 = vmatprep.subr.bf16.mxu0 0
  %243 = vmatpush1.bf16.msra.mxu0 0
  %244 = vmatprep.subr.bf16.mxu0 0
  %245 = vmatpush1.bf16.msra.mxu0 0
  %246 = vmatprep.subr.bf16.mxu0 0
  %247 = vmatpush1.bf16.msra.mxu0 0
  %248 = vmatprep.mubr.bf16.mxu0 0
  %249 = vmatmul.mubr.bf16.gmra.mrb[0].mxu0 %v132
  %v250 = vpop.f32.mrb[0].mxu0
  %v251 = vadd.f32 %v61, %v250
  %v252 = vpop.f32.mrb[0].mxu0
  %v253 = vadd.f32 %v65, %v252
  %v254 = vpop.f32.mrb[0].mxu0
  %v255 = vadd.f32 %v61, %v254
  %v256 = vpop.f32.mrb[0].mxu0
  %v257 = vadd.f32 %v65, %v256
  %258 = vmatprep.mubr.bf16.mxu0 0
  %259 = vmatmul.mubr.bf16.gmra.mrb[0].mxu0 %v135
  %v260 = vpop.f32.mrb[0].mxu0
  %v261 = vadd.f32 %v61, %v260
  %v262 = vpop.f32.mrb[0].mxu0
  %v263 = vadd.f32 %v65, %v262
  %v264 = vpop.f32.mrb[0].mxu0
  %v265 = vadd.f32 %v61, %v264
  %v266 = vpop.f32.mrb[0].mxu0
  %v267 = vadd.f32 %v65, %v266
  %268 = vmatprep.mubr.bf16.mxu0 0
  %269 = vmatmul.mubr.bf16.gmra.mrb[0].mxu0 %v138
  %v270 = vpop.f32.mrb[0].mxu0
  %v271 = vadd.f32 %v61, %v270
  %v272 = vpop.f32.mrb[0].mxu0
  %v273 = vadd.f32 %v65, %v272
  %v274 = vpop.f32.mrb[0].mxu0
  %v275 = vadd.f32 %v61, %v274
  %v276 = vpop.f32.mrb[0].mxu0
  %v277 = vadd.f32 %v65, %v276
  %278 = vmatprep.mubr.bf16.mxu0 0
  %279 = vmatmul.mubr.bf16.gmra.mrb[0].mxu0 %v141
  %v280 = vpop.f32.mrb[0].mxu0
  %v281 = vadd.f32 %v61, %v280
  %v282 = vpop.f32.mrb[0].mxu0
  %v283 = vadd.f32 %v65, %v282
  %v284 = vpop.f32.mrb[0].mxu0
  %v285 = vadd.f32 %v61, %v284
  %v286 = vpop.f32.mrb[0].mxu0
  %v287 = vadd.f32 %v65, %v286
  %288 = vdwg.mxu0
  %289 = vst [vmem:[#allocation2] sm:$0xff] %v178
  %290 = vst [vmem:[#allocation2 + $0x8] sm:$0xff] %v180
  %291 = vst [vmem:[#allocation2 + $0x10] sm:$0xff] %v251
  %292 = vst [vmem:[#allocation2 + $0x18] sm:$0xff] %v253
  %293 = vst [vmem:[#allocation2 + $0x20] sm:$0xff] %v182
  %294 = vst [vmem:[#allocation2 + $0x28] sm:$0xff] %v184
  %295 = vst [vmem:[#allocation2 + $0x30] sm:$0xff] %v255
  %296 = vst [vmem:[#allocation2 + $0x38] sm:$0xff] %v257
  %297 = vst [vmem:[#allocation2 + $0x40] sm:$0xff] %v188
  %298 = vst [vmem:[#allocation2 + $0x48] sm:$0xff] %v190
  %299 = vst [vmem:[#allocation2 + $0x50] sm:$0xff] %v261
  %300 = vst [vmem:[#allocation2 + $0x58] sm:$0xff] %v263
  %301 = vst [vmem:[#allocation2 + $0x60] sm:$0xff] %v192
  %302 = vst [vmem:[#allocation2 + $0x68] sm:$0xff] %v194
  %303 = vst [vmem:[#allocation2 + $0x70] sm:$0xff] %v265
  %304 = vst [vmem:[#allocation2 + $0x78] sm:$0xff] %v267
  %305 = vst [vmem:[#allocation2 + $0x80] sm:$0xff] %v198
  %306 = vst [vmem:[#allocation2 + $0x88] sm:$0xff] %v200
  %307 = vst [vmem:[#allocation2 + $0x90] sm:$0xff] %v271
  %308 = vst [vmem:[#allocation2 + $0x98] sm:$0xff] %v273
  %309 = vst [vmem:[#allocation2 + $0xa0] sm:$0xff] %v202
  %310 = vst [vmem:[#allocation2 + $0xa8] sm:$0xff] %v204
  %311 = vst [vmem:[#allocation2 + $0xb0] sm:$0xff] %v275
  %312 = vst [vmem:[#allocation2 + $0xb8] sm:$0xff] %v277
  %313 = vst [vmem:[#allocation2 + $0xc0] sm:$0xff] %v208
  %314 = vst [vmem:[#allocation2 + $0xc8] sm:$0xff] %v210
  %315 = vst [vmem:[#allocation2 + $0xd0] sm:$0xff] %v281
  %316 = vst [vmem:[#allocation2 + $0xd8] sm:$0xff] %v283
  %317 = vst [vmem:[#allocation2 + $0xe0] sm:$0xff] %v212
  %318 = vst [vmem:[#allocation2 + $0xe8] sm:$0xff] %v214
  %319 = vst [vmem:[#allocation2 + $0xf0] sm:$0xff] %v285
  %320 = vst [vmem:[#allocation2 + $0xf8] sm:$0xff] %v287
  %v321 = vld [vmem:[%s2] sm:$0xff]
  %v322 = vld [vmem:[%s2 + $0x8] sm:$0xff]
  %v323 = vld [vmem:[%s2 + $0x10] sm:$0xff]
  %v324 = vld [vmem:[%s2 + $0x18] sm:$0xff]
  %v325 = vld [vmem:[%s2 + $0x20] sm:$0xff]
  %v326 = vld [vmem:[%s2 + $0x28] sm:$0xff]
  %v327 = vld [vmem:[%s2 + $0x30] sm:$0xff]
  %v328 = vld [vmem:[%s2 + $0x38] sm:$0xff]
  %v329 = vld [vmem:[%s2 + $0x40] sm:$0xff]
  %v330 = vld [vmem:[%s2 + $0x48] sm:$0xff]
  %v331 = vld [vmem:[%s2 + $0x50] sm:$0xff]
  %v332 = vld [vmem:[%s2 + $0x58] sm:$0xff]
  %v333 = vld [vmem:[%s2 + $0x60] sm:$0xff]
  %v334 = vld [vmem:[%s2 + $0x68] sm:$0xff]
  %v335 = vld [vmem:[%s2 + $0x70] sm:$0xff]
  %v336 = vld [vmem:[%s2 + $0x78] sm:$0xff]
  %v337 = vld [vmem:[%s2 + $0x80] sm:$0xff]
  %v338 = vld [vmem:[%s2 + $0x88] sm:$0xff]
  %v339 = vld [vmem:[%s2 + $0x90] sm:$0xff]
  %v340 = vld [vmem:[%s2 + $0x98] sm:$0xff]
  %v341 = vld [vmem:[%s2 + $0xa0] sm:$0xff]
  %v342 = vld [vmem:[%s2 + $0xa8] sm:$0xff]
  %v343 = vld [vmem:[%s2 + $0xb0] sm:$0xff]
  %v344 = vld [vmem:[%s2 + $0xb8] sm:$0xff]
  %v345 = vld [vmem:[%s2 + $0xc0] sm:$0xff]
  %v346 = vld [vmem:[%s2 + $0xc8] sm:$0xff]
  %v347 = vld [vmem:[%s2 + $0xd0] sm:$0xff]
  %v348 = vld [vmem:[%s2 + $0xd8] sm:$0xff]
  %v349 = vld [vmem:[%s2 + $0xe0] sm:$0xff]
  %v350 = vld [vmem:[%s2 + $0xe8] sm:$0xff]
  %v351 = vld [vmem:[%s2 + $0xf0] sm:$0xff]
  %v352 = vld [vmem:[%s2 + $0xf8] sm:$0xff]
  %v353 = vld [vmem:[%s4] sm:$0x1]
  %v354 = vld [vmem:[#allocation5] sm:$0x1]
  %v355 = vld [vmem:[#allocation3] sm:$0xff]
  %v356 = vld [vmem:[#allocation4] sm:$0xff]
  %s357 = smul.u32 0, 4
  %s358 = smul.addr %s357, 8
  %s359 = scalar_lea.vmem [#allocation2], %s358
  %v360 = vld [vmem:[%s359] sm:$0xff]
  %v361 = vld [vmem:[%s359 + $0x8] sm:$0xff]
  %v362 = vld [vmem:[%s359 + $0x10] sm:$0xff]
  %v363 = vld [vmem:[%s359 + $0x18] sm:$0xff]
  %v364 = vpack.c.bf16 %v355, %v355
  %v397 = vunpack.c.l.b16 %v321
  %v398 = vunpack.c.h.b16 %v321
  %v399 = vunpack.c.l.b16 %v322
  %v400 = vunpack.c.h.b16 %v322
  %v401 = vunpack.c.l.b16 %v323
  %v402 = vunpack.c.h.b16 %v323
  %v403 = vunpack.c.l.b16 %v324
  %v404 = vunpack.c.h.b16 %v324
  %v405 = vunpack.c.l.b16 %v325
  %v406 = vunpack.c.h.b16 %v325
  %v407 = vunpack.c.l.b16 %v326
  %v408 = vunpack.c.h.b16 %v326
  %v409 = vunpack.c.l.b16 %v327
  %v410 = vunpack.c.h.b16 %v327
  %v411 = vunpack.c.l.b16 %v328
  %v412 = vunpack.c.h.b16 %v328
  %v413 = vunpack.c.l.b16 %v329
  %v414 = vunpack.c.h.b16 %v329
  %v415 = vunpack.c.l.b16 %v330
  %v416 = vunpack.c.h.b16 %v330
  %v417 = vunpack.c.l.b16 %v331
  %v418 = vunpack.c.h.b16 %v331
  %v419 = vunpack.c.l.b16 %v332
  %v420 = vunpack.c.h.b16 %v332
  %v421 = vunpack.c.l.b16 %v333
  %v422 = vunpack.c.h.b16 %v333
  %v423 = vunpack.c.l.b16 %v334
  %v424 = vunpack.c.h.b16 %v334
  %v425 = vunpack.c.l.b16 %v335
  %v426 = vunpack.c.h.b16 %v335
  %v427 = vunpack.c.l.b16 %v336
  %v428 = vunpack.c.h.b16 %v336
  %v429 = vunpack.c.l.b16 %v337
  %v430 = vunpack.c.h.b16 %v337
  %v431 = vunpack.c.l.b16 %v338
  %v432 = vunpack.c.h.b16 %v338
  %v433 = vunpack.c.l.b16 %v339
  %v434 = vunpack.c.h.b16 %v339
  %v435 = vunpack.c.l.b16 %v340
  %v436 = vunpack.c.h.b16 %v340
  %v437 = vunpack.c.l.b16 %v341
  %v438 = vunpack.c.h.b16 %v341
  %v439 = vunpack.c.l.b16 %v342
  %v440 = vunpack.c.h.b16 %v342
  %v441 = vunpack.c.l.b16 %v343
  %v442 = vunpack.c.h.b16 %v343
  %v443 = vunpack.c.l.b16 %v344
  %v444 = vunpack.c.h.b16 %v344
  %v445 = vunpack.c.l.b16 %v345
  %v446 = vunpack.c.h.b16 %v345
  %v447 = vunpack.c.l.b16 %v346
  %v448 = vunpack.c.h.b16 %v346
  %v449 = vunpack.c.l.b16 %v347
  %v450 = vunpack.c.h.b16 %v347
  %v451 = vunpack.c.l.b16 %v348
  %v452 = vunpack.c.h.b16 %v348
  %v453 = vunpack.c.l.b16 %v349
  %v454 = vunpack.c.h.b16 %v349
  %v455 = vunpack.c.l.b16 %v350
  %v456 = vunpack.c.h.b16 %v350
  %v457 = vunpack.c.l.b16 %v351
  %v458 = vunpack.c.h.b16 %v351
  %v459 = vunpack.c.l.b16 %v352
  %v460 = vunpack.c.h.b16 %v352
  %v461 = vpack.c.b16 %v401, %v397
  %v462 = vpack.c.b16 %v402, %v398
  %v463 = vpack.c.b16 %v403, %v399
  %v464 = vpack.c.b16 %v404, %v400
  %v465 = vpack.c.b16 %v409, %v405
  %v466 = vpack.c.b16 %v410, %v406
  %v467 = vpack.c.b16 %v411, %v407
  %v468 = vpack.c.b16 %v412, %v408
  %v469 = vpack.c.b16 %v417, %v413
  %v470 = vpack.c.b16 %v418, %v414
  %v471 = vpack.c.b16 %v419, %v415
  %v472 = vpack.c.b16 %v420, %v416
  %v473 = vpack.c.b16 %v425, %v421
  %v474 = vpack.c.b16 %v426, %v422
  %v475 = vpack.c.b16 %v427, %v423
  %v476 = vpack.c.b16 %v428, %v424
  %v477 = vpack.c.b16 %v433, %v429
  %v478 = vpack.c.b16 %v434, %v430
  %v479 = vpack.c.b16 %v435, %v431
  %v480 = vpack.c.b16 %v436, %v432
  %v481 = vpack.c.b16 %v441, %v437
  %v482 = vpack.c.b16 %v442, %v438
  %v483 = vpack.c.b16 %v443, %v439
  %v484 = vpack.c.b16 %v444, %v440
  %v485 = vpack.c.b16 %v449, %v445
  %v486 = vpack.c.b16 %v450, %v446
  %v487 = vpack.c.b16 %v451, %v447
  %v488 = vpack.c.b16 %v452, %v448
  %v489 = vpack.c.b16 %v457, %v453
  %v490 = vpack.c.b16 %v458, %v454
  %v491 = vpack.c.b16 %v459, %v455
  %v492 = vpack.c.b16 %v460, %v456
  %525 = vmatprep.subr.bf16.mxu0 %v462
  %526 = vmatpush1.bf16.msra.mxu0 %v461
  %527 = vmatprep.subr.bf16.mxu0 %v466
  %528 = vmatpush1.bf16.msra.mxu0 %v465
  %529 = vmatprep.subr.bf16.mxu0 %v470
  %530 = vmatpush1.bf16.msra.mxu0 %v469
  %531 = vmatprep.subr.bf16.mxu0 %v474
  %532 = vmatpush1.bf16.msra.mxu0 %v473
  %533 = vmatprep.subr.bf16.mxu0 %v478
  %534 = vmatpush1.bf16.msra.mxu0 %v477
  %535 = vmatprep.subr.bf16.mxu0 %v482
  %536 = vmatpush1.bf16.msra.mxu0 %v481
  %537 = vmatprep.subr.bf16.mxu0 %v486
  %538 = vmatpush1.bf16.msra.mxu0 %v485
  %539 = vmatprep.subr.bf16.mxu0 %v490
  %540 = vmatpush1.bf16.msra.mxu0 %v489
  %541 = vmatprep.subr.bf16.mxu0 0
  %542 = vmatpush1.bf16.msra.mxu0 0
  %543 = vmatprep.subr.bf16.mxu0 0
  %544 = vmatpush1.bf16.msra.mxu0 0
  %545 = vmatprep.subr.bf16.mxu0 0
  %546 = vmatpush1.bf16.msra.mxu0 0
  %547 = vmatprep.subr.bf16.mxu0 0
  %548 = vmatpush1.bf16.msra.mxu0 0
  %549 = vmatprep.subr.bf16.mxu0 0
  %550 = vmatpush1.bf16.msra.mxu0 0
  %551 = vmatprep.subr.bf16.mxu0 0
  %552 = vmatpush1.bf16.msra.mxu0 0
  %553 = vmatprep.subr.bf16.mxu0 0
  %554 = vmatpush1.bf16.msra.mxu0 0
  %555 = vmatprep.subr.bf16.mxu0 0
  %556 = vmatpush1.bf16.msra.mxu0 0
  %557 = vmatprep.mubr.bf16.mxu0 0
  %558 = vmatmul.mubr.bf16.gmra.mrb[0].mxu0 %v364
  %v559 = vpop.f32.mrb[0].mxu0
  %v560 = vadd.f32 0.0, %v559
  %v561 = vpop.f32.mrb[0].mxu0
  %v562 = vadd.f32 0.0, %v561
  %v563 = vpop.f32.mrb[0].mxu0
  %v564 = vpop.f32.mrb[0].mxu0
  %565 = vdwg.mxu0
  %566 = vmatprep.subr.bf16.mxu0 %v464
  %567 = vmatpush1.bf16.msra.mxu0 %v463
  %568 = vmatprep.subr.bf16.mxu0 %v468
  %569 = vmatpush1.bf16.msra.mxu0 %v467
  %570 = vmatprep.subr.bf16.mxu0 %v472
  %571 = vmatpush1.bf16.msra.mxu0 %v471
  %572 = vmatprep.subr.bf16.mxu0 %v476
  %573 = vmatpush1.bf16.msra.mxu0 %v475
  %574 = vmatprep.subr.bf16.mxu0 %v480
  %575 = vmatpush1.bf16.msra.mxu0 %v479
  %576 = vmatprep.subr.bf16.mxu0 %v484
  %577 = vmatpush1.bf16.msra.mxu0 %v483
  %578 = vmatprep.subr.bf16.mxu0 %v488
  %579 = vmatpush1.bf16.msra.mxu0 %v487
  %580 = vmatprep.subr.bf16.mxu0 %v492
  %581 = vmatpush1.bf16.msra.mxu0 %v491
  %582 = vmatprep.subr.bf16.mxu0 0
  %583 = vmatpush1.bf16.msra.mxu0 0
  %584 = vmatprep.subr.bf16.mxu0 0
  %585 = vmatpush1.bf16.msra.mxu0 0
  %586 = vmatprep.subr.bf16.mxu0 0
  %587 = vmatpush1.bf16.msra.mxu0 0
  %588 = vmatprep.subr.bf16.mxu0 0
  %589 = vmatpush1.bf16.msra.mxu0 0
  %590 = vmatprep.subr.bf16.mxu0 0
  %591 = vmatpush1.bf16.msra.mxu0 0
  %592 = vmatprep.subr.bf16.mxu0 0
  %593 = vmatpush1.bf16.msra.mxu0 0
  %594 = vmatprep.subr.bf16.mxu0 0
  %595 = vmatpush1.bf16.msra.mxu0 0
  %596 = vmatprep.subr.bf16.mxu0 0
  %597 = vmatpush1.bf16.msra.mxu0 0
  %598 = vmatprep.mubr.bf16.mxu0 0
  %599 = vmatmul.mubr.bf16.gmra.mrb[0].mxu0 %v364
  %v600 = vpop.f32.mrb[0].mxu0
  %v601 = vadd.f32 0.0, %v600
  %v602 = vpop.f32.mrb[0].mxu0
  %v603 = vadd.f32 0.0, %v602
  %v604 = vpop.f32.mrb[0].mxu0
  %v605 = vpop.f32.mrb[0].mxu0
  %606 = vdwg.mxu0
  %v607 = vadd.f32 %v360, %v560
  %v608 = vadd.f32 %v361, %v562
  %v609 = vadd.f32 %v362, %v601
  %v610 = vadd.f32 %v363, %v603
  %v611 = vxor.u32 %v607, 2147483648
  %v612 = vmul.f32 %v611, 1.442695
  %v613 = vpow.pop %v612
  %v614 = vadd.f32 %v613, 1.0
  %v615 = vrcp.pop %v614
  %v616 = vmul.f32 1.0, %v615
  %v617 = vxor.u32 %v608, 2147483648
  %v618 = vmul.f32 %v617, 1.442695
  %v619 = vpow.pop %v618
  %v620 = vadd.f32 %v619, 1.0
  %v621 = vrcp.pop %v620
  %v622 = vmul.f32 1.0, %v621
  %v623 = vtanh.pop %v609
  %v624 = vxor.u32 %v610, 2147483648
  %v625 = vmul.f32 %v624, 1.442695
  %v626 = vpow.pop %v625
  %v627 = vadd.f32 %v626, 1.0
  %v628 = vrcp.pop %v627
  %v629 = vmul.f32 1.0, %v628
  %v630 = vmul.f32 %v622, %v356
  %v631 = vmul.f32 %v616, %v623
  %v632 = vadd.f32 %v630, %v631
  %v633 = vtanh.pop %v632
  %v634 = vmul.f32 %v629, %v633
  %v636 = vlaneseq
  %v637 = vshrl.u32 %v636, 7
  %v638 = vsub.s32 0, %v637
  %v639 = vrot.slane %v353, %v638
  %v641 = vmul.f32 %v634, %v639
  %642 = vadd.xlane.f32.xlu0 %v641
  %v643 = vpop.xlane.xlu0 %642
  %v645 = vlaneseq
  %v646 = vshrl.u32 %v645, 7
  %v647 = vsub.s32 0, %v646
  %v648 = vrot.slane %v354, %v647
  %v650 = vadd.f32 %v643, %v648
  %vm651 = vcmask 7168
  %652 = vst.msk [vmem:[%s6] sm:$0xff] %vm651, %v650
  %s653 = smul.u32 1, 4
  %s654 = smul.addr %s653, 8
  %s655 = scalar_lea.vmem [#allocation2], %s654
  %v656 = vld [vmem:[%s655] sm:$0xff]
  %v657 = vld [vmem:[%s655 + $0x8] sm:$0xff]
  %v658 = vld [vmem:[%s655 + $0x10] sm:$0xff]
  %v659 = vld [vmem:[%s655 + $0x18] sm:$0xff]
  %v660 = vpack.c.bf16 %v634, %v634
  %661 = vmatprep.subr.bf16.mxu0 %v462
  %662 = vmatpush1.bf16.msra.mxu0 %v461
  %663 = vmatprep.subr.bf16.mxu0 %v466
  %664 = vmatpush1.bf16.msra.mxu0 %v465
  %665 = vmatprep.subr.bf16.mxu0 %v470
  %666 = vmatpush1.bf16.msra.mxu0 %v469
  %667 = vmatprep.subr.bf16.mxu0 %v474
  %668 = vmatpush1.bf16.msra.mxu0 %v473
  %669 = vmatprep.subr.bf16.mxu0 %v478
  %670 = vmatpush1.bf16.msra.mxu0 %v477
  %671 = vmatprep.subr.bf16.mxu0 %v482
  %672 = vmatpush1.bf16.msra.mxu0 %v481
  %673 = vmatprep.subr.bf16.mxu0 %v486
  %674 = vmatpush1.bf16.msra.mxu0 %v485
  %675 = vmatprep.subr.bf16.mxu0 %v490
  %676 = vmatpush1.bf16.msra.mxu0 %v489
  %677 = vmatprep.subr.bf16.mxu0 0
  %678 = vmatpush1.bf16.msra.mxu0 0
  %679 = vmatprep.subr.bf16.mxu0 0
  %680 = vmatpush1.bf16.msra.mxu0 0
  %681 = vmatprep.subr.bf16.mxu0 0
  %682 = vmatpush1.bf16.msra.mxu0 0
  %683 = vmatprep.subr.bf16.mxu0 0
  %684 = vmatpush1.bf16.msra.mxu0 0
  %685 = vmatprep.subr.bf16.mxu0 0
  %686 = vmatpush1.bf16.msra.mxu0 0
  %687 = vmatprep.subr.bf16.mxu0 0
  %688 = vmatpush1.bf16.msra.mxu0 0
  %689 = vmatprep.subr.bf16.mxu0 0
  %690 = vmatpush1.bf16.msra.mxu0 0
  %691 = vmatprep.subr.bf16.mxu0 0
  %692 = vmatpush1.bf16.msra.mxu0 0
  %693 = vmatprep.mubr.bf16.mxu0 0
  %694 = vmatmul.mubr.bf16.gmra.mrb[0].mxu0 %v660
  %v695 = vpop.f32.mrb[0].mxu0
  %v696 = vadd.f32 0.0, %v695
  %v697 = vpop.f32.mrb[0].mxu0
  %v698 = vadd.f32 0.0, %v697
  %v699 = vpop.f32.mrb[0].mxu0
  %v700 = vpop.f32.mrb[0].mxu0
  %701 = vdwg.mxu0
  %702 = vmatprep.subr.bf16.mxu0 %v464
  %703 = vmatpush1.bf16.msra.mxu0 %v463
  %704 = vmatprep.subr.bf16.mxu0 %v468
  %705 = vmatpush1.bf16.msra.mxu0 %v467
  %706 = vmatprep.subr.bf16.mxu0 %v472
  %707 = vmatpush1.bf16.msra.mxu0 %v471
  %708 = vmatprep.subr.bf16.mxu0 %v476
  %709 = vmatpush1.bf16.msra.mxu0 %v475
  %710 = vmatprep.subr.bf16.mxu0 %v480
  %711 = vmatpush1.bf16.msra.mxu0 %v479
  %712 = vmatprep.subr.bf16.mxu0 %v484
  %713 = vmatpush1.bf16.msra.mxu0 %v483
  %714 = vmatprep.subr.bf16.mxu0 %v488
  %715 = vmatpush1.bf16.msra.mxu0 %v487
  %716 = vmatprep.subr.bf16.mxu0 %v492
  %717 = vmatpush1.bf16.msra.mxu0 %v491
  %718 = vmatprep.subr.bf16.mxu0 0
  %719 = vmatpush1.bf16.msra.mxu0 0
  %720 = vmatprep.subr.bf16.mxu0 0
  %721 = vmatpush1.bf16.msra.mxu0 0
  %722 = vmatprep.subr.bf16.mxu0 0
  %723 = vmatpush1.bf16.msra.mxu0 0
  %724 = vmatprep.subr.bf16.mxu0 0
  %725 = vmatpush1.bf16.msra.mxu0 0
  %726 = vmatprep.subr.bf16.mxu0 0
  %727 = vmatpush1.bf16.msra.mxu0 0
  %728 = vmatprep.subr.bf16.mxu0 0
  %729 = vmatpush1.bf16.msra.mxu0 0
  %730 = vmatprep.subr.bf16.mxu0 0
  %731 = vmatpush1.bf16.msra.mxu0 0
  %732 = vmatprep.subr.bf16.mxu0 0
  %733 = vmatpush1.bf16.msra.mxu0 0
  %734 = vmatprep.mubr.bf16.mxu0 0
  %735 = vmatmul.mubr.bf16.gmra.mrb[0].mxu0 %v660
  %v736 = vpop.f32.mrb[0].mxu0
  %v737 = vadd.f32 0.0, %v736
  %v738 = vpop.f32.mrb[0].mxu0
  %v739 = vadd.f32 0.0, %v738
  %v740 = vpop.f32.mrb[0].mxu0
  %v741 = vpop.f32.mrb[0].mxu0
  %742 = vdwg.mxu0
  %v743 = vadd.f32 %v656, %v696
  %v744 = vadd.f32 %v657, %v698
  %v745 = vadd.f32 %v658, %v737
  %v746 = vadd.f32 %v659, %v739
  %v747 = vxor.u32 %v743, 2147483648
  %v748 = vmul.f32 %v747, 1.442695
  %v749 = vpow.pop %v748
  %v750 = vadd.f32 %v749, 1.0
  %v751 = vrcp.pop %v750
  %v752 = vmul.f32 1.0, %v751
  %v753 = vxor.u32 %v744, 2147483648
  %v754 = vmul.f32 %v753, 1.442695
  %v755 = vpow.pop %v754
  %v756 = vadd.f32 %v755, 1.0
  %v757 = vrcp.pop %v756
  %v758 = vmul.f32 1.0, %v757
  %v759 = vtanh.pop %v745
  %v760 = vxor.u32 %v746, 2147483648
  %v761 = vmul.f32 %v760, 1.442695
  %v762 = vpow.pop %v761
  %v763 = vadd.f32 %v762, 1.0
  %v764 = vrcp.pop %v763
  %v765 = vmul.f32 1.0, %v764
  %v766 = vmul.f32 %v758, %v632
  %v767 = vmul.f32 %v752, %v759
  %v768 = vadd.f32 %v766, %v767
  %v769 = vtanh.pop %v768
  %v770 = vmul.f32 %v765, %v769
  %v771 = vmul.f32 %v770, %v639
  %772 = vadd.xlane.f32.xlu0 %v771
  %v773 = vpop.xlane.xlu0 %772
  %v774 = vadd.f32 %v773, %v648
  %s775 = scalar_lea.vmem %s6, 8
  %776 = vst.msk [vmem:[%s775] sm:$0xff] %vm651, %v774
  %s777 = smul.u32 2, 4
  %s778 = smul.addr %s777, 8
  %s779 = scalar_lea.vmem [#allocation2], %s778
  %v780 = vld [vmem:[%s779] sm:$0xff]
  %v781 = vld [vmem:[%s779 + $0x8] sm:$0xff]
  %v782 = vld [vmem:[%s779 + $0x10] sm:$0xff]
  %v783 = vld [vmem:[%s779 + $0x18] sm:$0xff]
  %v784 = vpack.c.bf16 %v770, %v770
  %785 = vmatprep.subr.bf16.mxu0 %v462
  %786 = vmatpush1.bf16.msra.mxu0 %v461
  %787 = vmatprep.subr.bf16.mxu0 %v466
  %788 = vmatpush1.bf16.msra.mxu0 %v465
  %789 = vmatprep.subr.bf16.mxu0 %v470
  %790 = vmatpush1.bf16.msra.mxu0 %v469
  %791 = vmatprep.subr.bf16.mxu0 %v474
  %792 = vmatpush1.bf16.msra.mxu0 %v473
  %793 = vmatprep.subr.bf16.mxu0 %v478
  %794 = vmatpush1.bf16.msra.mxu0 %v477
  %795 = vmatprep.subr.bf16.mxu0 %v482
  %796 = vmatpush1.bf16.msra.mxu0 %v481
  %797 = vmatprep.subr.bf16.mxu0 %v486
  %798 = vmatpush1.bf16.msra.mxu0 %v485
  %799 = vmatprep.subr.bf16.mxu0 %v490
  %800 = vmatpush1.bf16.msra.mxu0 %v489
  %801 = vmatprep.subr.bf16.mxu0 0
  %802 = vmatpush1.bf16.msra.mxu0 0
  %803 = vmatprep.subr.bf16.mxu0 0
  %804 = vmatpush1.bf16.msra.mxu0 0
  %805 = vmatprep.subr.bf16.mxu0 0
  %806 = vmatpush1.bf16.msra.mxu0 0
  %807 = vmatprep.subr.bf16.mxu0 0
  %808 = vmatpush1.bf16.msra.mxu0 0
  %809 = vmatprep.subr.bf16.mxu0 0
  %810 = vmatpush1.bf16.msra.mxu0 0
  %811 = vmatprep.subr.bf16.mxu0 0
  %812 = vmatpush1.bf16.msra.mxu0 0
  %813 = vmatprep.subr.bf16.mxu0 0
  %814 = vmatpush1.bf16.msra.mxu0 0
  %815 = vmatprep.subr.bf16.mxu0 0
  %816 = vmatpush1.bf16.msra.mxu0 0
  %817 = vmatprep.mubr.bf16.mxu0 0
  %818 = vmatmul.mubr.bf16.gmra.mrb[0].mxu0 %v784
  %v819 = vpop.f32.mrb[0].mxu0
  %v820 = vadd.f32 0.0, %v819
  %v821 = vpop.f32.mrb[0].mxu0
  %v822 = vadd.f32 0.0, %v821
  %v823 = vpop.f32.mrb[0].mxu0
  %v824 = vpop.f32.mrb[0].mxu0
  %825 = vdwg.mxu0
  %826 = vmatprep.subr.bf16.mxu0 %v464
  %827 = vmatpush1.bf16.msra.mxu0 %v463
  %828 = vmatprep.subr.bf16.mxu0 %v468
  %829 = vmatpush1.bf16.msra.mxu0 %v467
  %830 = vmatprep.subr.bf16.mxu0 %v472
  %831 = vmatpush1.bf16.msra.mxu0 %v471
  %832 = vmatprep.subr.bf16.mxu0 %v476
  %833 = vmatpush1.bf16.msra.mxu0 %v475
  %834 = vmatprep.subr.bf16.mxu0 %v480
  %835 = vmatpush1.bf16.msra.mxu0 %v479
  %836 = vmatprep.subr.bf16.mxu0 %v484
  %837 = vmatpush1.bf16.msra.mxu0 %v483
  %838 = vmatprep.subr.bf16.mxu0 %v488
  %839 = vmatpush1.bf16.msra.mxu0 %v487
  %840 = vmatprep.subr.bf16.mxu0 %v492
  %841 = vmatpush1.bf16.msra.mxu0 %v491
  %842 = vmatprep.subr.bf16.mxu0 0
  %843 = vmatpush1.bf16.msra.mxu0 0
  %844 = vmatprep.subr.bf16.mxu0 0
  %845 = vmatpush1.bf16.msra.mxu0 0
  %846 = vmatprep.subr.bf16.mxu0 0
  %847 = vmatpush1.bf16.msra.mxu0 0
  %848 = vmatprep.subr.bf16.mxu0 0
  %849 = vmatpush1.bf16.msra.mxu0 0
  %850 = vmatprep.subr.bf16.mxu0 0
  %851 = vmatpush1.bf16.msra.mxu0 0
  %852 = vmatprep.subr.bf16.mxu0 0
  %853 = vmatpush1.bf16.msra.mxu0 0
  %854 = vmatprep.subr.bf16.mxu0 0
  %855 = vmatpush1.bf16.msra.mxu0 0
  %856 = vmatprep.subr.bf16.mxu0 0
  %857 = vmatpush1.bf16.msra.mxu0 0
  %858 = vmatprep.mubr.bf16.mxu0 0
  %859 = vmatmul.mubr.bf16.gmra.mrb[0].mxu0 %v784
  %v860 = vpop.f32.mrb[0].mxu0
  %v861 = vadd.f32 0.0, %v860
  %v862 = vpop.f32.mrb[0].mxu0
  %v863 = vadd.f32 0.0, %v862
  %v864 = vpop.f32.mrb[0].mxu0
  %v865 = vpop.f32.mrb[0].mxu0
  %866 = vdwg.mxu0
  %v867 = vadd.f32 %v780, %v820
  %v868 = vadd.f32 %v781, %v822
  %v869 = vadd.f32 %v782, %v861
  %v870 = vadd.f32 %v783, %v863
  %v871 = vxor.u32 %v867, 2147483648
  %v872 = vmul.f32 %v871, 1.442695
  %v873 = vpow.pop %v872
  %v874 = vadd.f32 %v873, 1.0
  %v875 = vrcp.pop %v874
  %v876 = vmul.f32 1.0, %v875
  %v877 = vxor.u32 %v868, 2147483648
  %v878 = vmul.f32 %v877, 1.442695
  %v879 = vpow.pop %v878
  %v880 = vadd.f32 %v879, 1.0
  %v881 = vrcp.pop %v880
  %v882 = vmul.f32 1.0, %v881
  %v883 = vtanh.pop %v869
  %v884 = vxor.u32 %v870, 2147483648
  %v885 = vmul.f32 %v884, 1.442695
  %v886 = vpow.pop %v885
  %v887 = vadd.f32 %v886, 1.0
  %v888 = vrcp.pop %v887
  %v889 = vmul.f32 1.0, %v888
  %v890 = vmul.f32 %v882, %v768
  %v891 = vmul.f32 %v876, %v883
  %v892 = vadd.f32 %v890, %v891
  %v893 = vtanh.pop %v892
  %v894 = vmul.f32 %v889, %v893
  %v895 = vmul.f32 %v894, %v639
  %896 = vadd.xlane.f32.xlu0 %v895
  %v897 = vpop.xlane.xlu0 %896
  %v898 = vadd.f32 %v897, %v648
  %s899 = scalar_lea.vmem %s6, 16
  %900 = vst.msk [vmem:[%s899] sm:$0xff] %vm651, %v898
  %s901 = smul.u32 3, 4
  %s902 = smul.addr %s901, 8
  %s903 = scalar_lea.vmem [#allocation2], %s902
  %v904 = vld [vmem:[%s903] sm:$0xff]
  %v905 = vld [vmem:[%s903 + $0x8] sm:$0xff]
  %v906 = vld [vmem:[%s903 + $0x10] sm:$0xff]
  %v907 = vld [vmem:[%s903 + $0x18] sm:$0xff]
  %v908 = vpack.c.bf16 %v894, %v894
  %909 = vmatprep.subr.bf16.mxu0 %v462
  %910 = vmatpush1.bf16.msra.mxu0 %v461
  %911 = vmatprep.subr.bf16.mxu0 %v466
  %912 = vmatpush1.bf16.msra.mxu0 %v465
  %913 = vmatprep.subr.bf16.mxu0 %v470
  %914 = vmatpush1.bf16.msra.mxu0 %v469
  %915 = vmatprep.subr.bf16.mxu0 %v474
  %916 = vmatpush1.bf16.msra.mxu0 %v473
  %917 = vmatprep.subr.bf16.mxu0 %v478
  %918 = vmatpush1.bf16.msra.mxu0 %v477
  %919 = vmatprep.subr.bf16.mxu0 %v482
  %920 = vmatpush1.bf16.msra.mxu0 %v481
  %921 = vmatprep.subr.bf16.mxu0 %v486
  %922 = vmatpush1.bf16.msra.mxu0 %v485
  %923 = vmatprep.subr.bf16.mxu0 %v490
  %924 = vmatpush1.bf16.msra.mxu0 %v489
  %925 = vmatprep.subr.bf16.mxu0 0
  %926 = vmatpush1.bf16.msra.mxu0 0
  %927 = vmatprep.subr.bf16.mxu0 0
  %928 = vmatpush1.bf16.msra.mxu0 0
  %929 = vmatprep.subr.bf16.mxu0 0
  %930 = vmatpush1.bf16.msra.mxu0 0
  %931 = vmatprep.subr.bf16.mxu0 0
  %932 = vmatpush1.bf16.msra.mxu0 0
  %933 = vmatprep.subr.bf16.mxu0 0
  %934 = vmatpush1.bf16.msra.mxu0 0
  %935 = vmatprep.subr.bf16.mxu0 0
  %936 = vmatpush1.bf16.msra.mxu0 0
  %937 = vmatprep.subr.bf16.mxu0 0
  %938 = vmatpush1.bf16.msra.mxu0 0
  %939 = vmatprep.subr.bf16.mxu0 0
  %940 = vmatpush1.bf16.msra.mxu0 0
  %941 = vmatprep.mubr.bf16.mxu0 0
  %942 = vmatmul.mubr.bf16.gmra.mrb[0].mxu0 %v908
  %v943 = vpop.f32.mrb[0].mxu0
  %v944 = vadd.f32 0.0, %v943
  %v945 = vpop.f32.mrb[0].mxu0
  %v946 = vadd.f32 0.0, %v945
  %v947 = vpop.f32.mrb[0].mxu0
  %v948 = vpop.f32.mrb[0].mxu0
  %949 = vdwg.mxu0
  %950 = vmatprep.subr.bf16.mxu0 %v464
  %951 = vmatpush1.bf16.msra.mxu0 %v463
  %952 = vmatprep.subr.bf16.mxu0 %v468
  %953 = vmatpush1.bf16.msra.mxu0 %v467
  %954 = vmatprep.subr.bf16.mxu0 %v472
  %955 = vmatpush1.bf16.msra.mxu0 %v471
  %956 = vmatprep.subr.bf16.mxu0 %v476
  %957 = vmatpush1.bf16.msra.mxu0 %v475
  %958 = vmatprep.subr.bf16.mxu0 %v480
  %959 = vmatpush1.bf16.msra.mxu0 %v479
  %960 = vmatprep.subr.bf16.mxu0 %v484
  %961 = vmatpush1.bf16.msra.mxu0 %v483
  %962 = vmatprep.subr.bf16.mxu0 %v488
  %963 = vmatpush1.bf16.msra.mxu0 %v487
  %964 = vmatprep.subr.bf16.mxu0 %v492
  %965 = vmatpush1.bf16.msra.mxu0 %v491
  %966 = vmatprep.subr.bf16.mxu0 0
  %967 = vmatpush1.bf16.msra.mxu0 0
  %968 = vmatprep.subr.bf16.mxu0 0
  %969 = vmatpush1.bf16.msra.mxu0 0
  %970 = vmatprep.subr.bf16.mxu0 0
  %971 = vmatpush1.bf16.msra.mxu0 0
  %972 = vmatprep.subr.bf16.mxu0 0
  %973 = vmatpush1.bf16.msra.mxu0 0
  %974 = vmatprep.subr.bf16.mxu0 0
  %975 = vmatpush1.bf16.msra.mxu0 0
  %976 = vmatprep.subr.bf16.mxu0 0
  %977 = vmatpush1.bf16.msra.mxu0 0
  %978 = vmatprep.subr.bf16.mxu0 0
  %979 = vmatpush1.bf16.msra.mxu0 0
  %980 = vmatprep.subr.bf16.mxu0 0
  %981 = vmatpush1.bf16.msra.mxu0 0
  %982 = vmatprep.mubr.bf16.mxu0 0
  %983 = vmatmul.mubr.bf16.gmra.mrb[0].mxu0 %v908
  %v984 = vpop.f32.mrb[0].mxu0
  %v985 = vadd.f32 0.0, %v984
  %v986 = vpop.f32.mrb[0].mxu0
  %v987 = vadd.f32 0.0, %v986
  %v988 = vpop.f32.mrb[0].mxu0
  %v989 = vpop.f32.mrb[0].mxu0
  %990 = vdwg.mxu0
  %v991 = vadd.f32 %v904, %v944
  %v992 = vadd.f32 %v905, %v946
  %v993 = vadd.f32 %v906, %v985
  %v994 = vadd.f32 %v907, %v987
  %v995 = vxor.u32 %v991, 2147483648
  %v996 = vmul.f32 %v995, 1.442695
  %v997 = vpow.pop %v996
  %v998 = vadd.f32 %v997, 1.0
  %v999 = vrcp.pop %v998
  %v1000 = vmul.f32 1.0, %v999
  %v1001 = vxor.u32 %v992, 2147483648
  %v1002 = vmul.f32 %v1001, 1.442695
  %v1003 = vpow.pop %v1002
  %v1004 = vadd.f32 %v1003, 1.0
  %v1005 = vrcp.pop %v1004
  %v1006 = vmul.f32 1.0, %v1005
  %v1007 = vtanh.pop %v993
  %v1008 = vxor.u32 %v994, 2147483648
  %v1009 = vmul.f32 %v1008, 1.442695
  %v1010 = vpow.pop %v1009
  %v1011 = vadd.f32 %v1010, 1.0
  %v1012 = vrcp.pop %v1011
  %v1013 = vmul.f32 1.0, %v1012
  %v1014 = vmul.f32 %v1006, %v892
  %v1015 = vmul.f32 %v1000, %v1007
  %v1016 = vadd.f32 %v1014, %v1015
  %v1017 = vtanh.pop %v1016
  %v1018 = vmul.f32 %v1013, %v1017
  %v1019 = vmul.f32 %v1018, %v639
  %1020 = vadd.xlane.f32.xlu0 %v1019
  %v1021 = vpop.xlane.xlu0 %1020
  %v1022 = vadd.f32 %v1021, %v648
  %s1023 = scalar_lea.vmem %s6, 24
  %1024 = vst.msk [vmem:[%s1023] sm:$0xff] %vm651, %v1022
  %s1025 = smul.u32 4, 4
  %s1026 = smul.addr %s1025, 8
  %s1027 = scalar_lea.vmem [#allocation2], %s1026
  %v1028 = vld [vmem:[%s1027] sm:$0xff]
  %v1029 = vld [vmem:[%s1027 + $0x8] sm:$0xff]
  %v1030 = vld [vmem:[%s1027 + $0x10] sm:$0xff]
  %v1031 = vld [vmem:[%s1027 + $0x18] sm:$0xff]
  %v1032 = vpack.c.bf16 %v1018, %v1018
  %1033 = vmatprep.subr.bf16.mxu0 %v462
  %1034 = vmatpush1.bf16.msra.mxu0 %v461
  %1035 = vmatprep.subr.bf16.mxu0 %v466
  %1036 = vmatpush1.bf16.msra.mxu0 %v465
  %1037 = vmatprep.subr.bf16.mxu0 %v470
  %1038 = vmatpush1.bf16.msra.mxu0 %v469
  %1039 = vmatprep.subr.bf16.mxu0 %v474
  %1040 = vmatpush1.bf16.msra.mxu0 %v473
  %1041 = vmatprep.subr.bf16.mxu0 %v478
  %1042 = vmatpush1.bf16.msra.mxu0 %v477
  %1043 = vmatprep.subr.bf16.mxu0 %v482
  %1044 = vmatpush1.bf16.msra.mxu0 %v481
  %1045 = vmatprep.subr.bf16.mxu0 %v486
  %1046 = vmatpush1.bf16.msra.mxu0 %v485
  %1047 = vmatprep.subr.bf16.mxu0 %v490
  %1048 = vmatpush1.bf16.msra.mxu0 %v489
  %1049 = vmatprep.subr.bf16.mxu0 0
  %1050 = vmatpush1.bf16.msra.mxu0 0
  %1051 = vmatprep.subr.bf16.mxu0 0
  %1052 = vmatpush1.bf16.msra.mxu0 0
  %1053 = vmatprep.subr.bf16.mxu0 0
  %1054 = vmatpush1.bf16.msra.mxu0 0
  %1055 = vmatprep.subr.bf16.mxu0 0
  %1056 = vmatpush1.bf16.msra.mxu0 0
  %1057 = vmatprep.subr.bf16.mxu0 0
  %1058 = vmatpush1.bf16.msra.mxu0 0
  %1059 = vmatprep.subr.bf16.mxu0 0
  %1060 = vmatpush1.bf16.msra.mxu0 0
  %1061 = vmatprep.subr.bf16.mxu0 0
  %1062 = vmatpush1.bf16.msra.mxu0 0
  %1063 = vmatprep.subr.bf16.mxu0 0
  %1064 = vmatpush1.bf16.msra.mxu0 0
  %1065 = vmatprep.mubr.bf16.mxu0 0
  %1066 = vmatmul.mubr.bf16.gmra.mrb[0].mxu0 %v1032
  %v1067 = vpop.f32.mrb[0].mxu0
  %v1068 = vadd.f32 0.0, %v1067
  %v1069 = vpop.f32.mrb[0].mxu0
  %v1070 = vadd.f32 0.0, %v1069
  %v1071 = vpop.f32.mrb[0].mxu0
  %v1072 = vpop.f32.mrb[0].mxu0
  %1073 = vdwg.mxu0
  %1074 = vmatprep.subr.bf16.mxu0 %v464
  %1075 = vmatpush1.bf16.msra.mxu0 %v463
  %1076 = vmatprep.subr.bf16.mxu0 %v468
  %1077 = vmatpush1.bf16.msra.mxu0 %v467
  %1078 = vmatprep.subr.bf16.mxu0 %v472
  %1079 = vmatpush1.bf16.msra.mxu0 %v471
  %1080 = vmatprep.subr.bf16.mxu0 %v476
  %1081 = vmatpush1.bf16.msra.mxu0 %v475
  %1082 = vmatprep.subr.bf16.mxu0 %v480
  %1083 = vmatpush1.bf16.msra.mxu0 %v479
  %1084 = vmatprep.subr.bf16.mxu0 %v484
  %1085 = vmatpush1.bf16.msra.mxu0 %v483
  %1086 = vmatprep.subr.bf16.mxu0 %v488
  %1087 = vmatpush1.bf16.msra.mxu0 %v487
  %1088 = vmatprep.subr.bf16.mxu0 %v492
  %1089 = vmatpush1.bf16.msra.mxu0 %v491
  %1090 = vmatprep.subr.bf16.mxu0 0
  %1091 = vmatpush1.bf16.msra.mxu0 0
  %1092 = vmatprep.subr.bf16.mxu0 0
  %1093 = vmatpush1.bf16.msra.mxu0 0
  %1094 = vmatprep.subr.bf16.mxu0 0
  %1095 = vmatpush1.bf16.msra.mxu0 0
  %1096 = vmatprep.subr.bf16.mxu0 0
  %1097 = vmatpush1.bf16.msra.mxu0 0
  %1098 = vmatprep.subr.bf16.mxu0 0
  %1099 = vmatpush1.bf16.msra.mxu0 0
  %1100 = vmatprep.subr.bf16.mxu0 0
  %1101 = vmatpush1.bf16.msra.mxu0 0
  %1102 = vmatprep.subr.bf16.mxu0 0
  %1103 = vmatpush1.bf16.msra.mxu0 0
  %1104 = vmatprep.subr.bf16.mxu0 0
  %1105 = vmatpush1.bf16.msra.mxu0 0
  %1106 = vmatprep.mubr.bf16.mxu0 0
  %1107 = vmatmul.mubr.bf16.gmra.mrb[0].mxu0 %v1032
  %v1108 = vpop.f32.mrb[0].mxu0
  %v1109 = vadd.f32 0.0, %v1108
  %v1110 = vpop.f32.mrb[0].mxu0
  %v1111 = vadd.f32 0.0, %v1110
  %v1112 = vpop.f32.mrb[0].mxu0
  %v1113 = vpop.f32.mrb[0].mxu0
  %1114 = vdwg.mxu0
  %v1115 = vadd.f32 %v1028, %v1068
  %v1116 = vadd.f32 %v1029, %v1070
  %v1117 = vadd.f32 %v1030, %v1109
  %v1118 = vadd.f32 %v1031, %v1111
  %v1119 = vxor.u32 %v1115, 2147483648
  %v1120 = vmul.f32 %v1119, 1.442695
  %v1121 = vpow.pop %v1120
  %v1122 = vadd.f32 %v1121, 1.0
  %v1123 = vrcp.pop %v1122
  %v1124 = vmul.f32 1.0, %v1123
  %v1125 = vxor.u32 %v1116, 2147483648
  %v1126 = vmul.f32 %v1125, 1.442695
  %v1127 = vpow.pop %v1126
  %v1128 = vadd.f32 %v1127, 1.0
  %v1129 = vrcp.pop %v1128
  %v1130 = vmul.f32 1.0, %v1129
  %v1131 = vtanh.pop %v1117
  %v1132 = vxor.u32 %v1118, 2147483648
  %v1133 = vmul.f32 %v1132, 1.442695
  %v1134 = vpow.pop %v1133
  %v1135 = vadd.f32 %v1134, 1.0
  %v1136 = vrcp.pop %v1135
  %v1137 = vmul.f32 1.0, %v1136
  %v1138 = vmul.f32 %v1130, %v1016
  %v1139 = vmul.f32 %v1124, %v1131
  %v1140 = vadd.f32 %v1138, %v1139
  %v1141 = vtanh.pop %v1140
  %v1142 = vmul.f32 %v1137, %v1141
  %v1143 = vmul.f32 %v1142, %v639
  %1144 = vadd.xlane.f32.xlu0 %v1143
  %v1145 = vpop.xlane.xlu0 %1144
  %v1146 = vadd.f32 %v1145, %v648
  %s1147 = scalar_lea.vmem %s6, 32
  %1148 = vst.msk [vmem:[%s1147] sm:$0xff] %vm651, %v1146
  %s1149 = smul.u32 5, 4
  %s1150 = smul.addr %s1149, 8
  %s1151 = scalar_lea.vmem [#allocation2], %s1150
  %v1152 = vld [vmem:[%s1151] sm:$0xff]
  %v1153 = vld [vmem:[%s1151 + $0x8] sm:$0xff]
  %v1154 = vld [vmem:[%s1151 + $0x10] sm:$0xff]
  %v1155 = vld [vmem:[%s1151 + $0x18] sm:$0xff]
  %v1156 = vpack.c.bf16 %v1142, %v1142
  %1157 = vmatprep.subr.bf16.mxu0 %v462
  %1158 = vmatpush1.bf16.msra.mxu0 %v461
  %1159 = vmatprep.subr.bf16.mxu0 %v466
  %1160 = vmatpush1.bf16.msra.mxu0 %v465
  %1161 = vmatprep.subr.bf16.mxu0 %v470
  %1162 = vmatpush1.bf16.msra.mxu0 %v469
  %1163 = vmatprep.subr.bf16.mxu0 %v474
  %1164 = vmatpush1.bf16.msra.mxu0 %v473
  %1165 = vmatprep.subr.bf16.mxu0 %v478
  %1166 = vmatpush1.bf16.msra.mxu0 %v477
  %1167 = vmatprep.subr.bf16.mxu0 %v482
  %1168 = vmatpush1.bf16.msra.mxu0 %v481
  %1169 = vmatprep.subr.bf16.mxu0 %v486
  %1170 = vmatpush1.bf16.msra.mxu0 %v485
  %1171 = vmatprep.subr.bf16.mxu0 %v490
  %1172 = vmatpush1.bf16.msra.mxu0 %v489
  %1173 = vmatprep.subr.bf16.mxu0 0
  %1174 = vmatpush1.bf16.msra.mxu0 0
  %1175 = vmatprep.subr.bf16.mxu0 0
  %1176 = vmatpush1.bf16.msra.mxu0 0
  %1177 = vmatprep.subr.bf16.mxu0 0
  %1178 = vmatpush1.bf16.msra.mxu0 0
  %1179 = vmatprep.subr.bf16.mxu0 0
  %1180 = vmatpush1.bf16.msra.mxu0 0
  %1181 = vmatprep.subr.bf16.mxu0 0
  %1182 = vmatpush1.bf16.msra.mxu0 0
  %1183 = vmatprep.subr.bf16.mxu0 0
  %1184 = vmatpush1.bf16.msra.mxu0 0
  %1185 = vmatprep.subr.bf16.mxu0 0
  %1186 = vmatpush1.bf16.msra.mxu0 0
  %1187 = vmatprep.subr.bf16.mxu0 0
  %1188 = vmatpush1.bf16.msra.mxu0 0
  %1189 = vmatprep.mubr.bf16.mxu0 0
  %1190 = vmatmul.mubr.bf16.gmra.mrb[0].mxu0 %v1156
  %v1191 = vpop.f32.mrb[0].mxu0
  %v1192 = vadd.f32 0.0, %v1191
  %v1193 = vpop.f32.mrb[0].mxu0
  %v1194 = vadd.f32 0.0, %v1193
  %v1195 = vpop.f32.mrb[0].mxu0
  %v1196 = vpop.f32.mrb[0].mxu0
  %1197 = vdwg.mxu0
  %1198 = vmatprep.subr.bf16.mxu0 %v464
  %1199 = vmatpush1.bf16.msra.mxu0 %v463
  %1200 = vmatprep.subr.bf16.mxu0 %v468
  %1201 = vmatpush1.bf16.msra.mxu0 %v467
  %1202 = vmatprep.subr.bf16.mxu0 %v472
  %1203 = vmatpush1.bf16.msra.mxu0 %v471
  %1204 = vmatprep.subr.bf16.mxu0 %v476
  %1205 = vmatpush1.bf16.msra.mxu0 %v475
  %1206 = vmatprep.subr.bf16.mxu0 %v480
  %1207 = vmatpush1.bf16.msra.mxu0 %v479
  %1208 = vmatprep.subr.bf16.mxu0 %v484
  %1209 = vmatpush1.bf16.msra.mxu0 %v483
  %1210 = vmatprep.subr.bf16.mxu0 %v488
  %1211 = vmatpush1.bf16.msra.mxu0 %v487
  %1212 = vmatprep.subr.bf16.mxu0 %v492
  %1213 = vmatpush1.bf16.msra.mxu0 %v491
  %1214 = vmatprep.subr.bf16.mxu0 0
  %1215 = vmatpush1.bf16.msra.mxu0 0
  %1216 = vmatprep.subr.bf16.mxu0 0
  %1217 = vmatpush1.bf16.msra.mxu0 0
  %1218 = vmatprep.subr.bf16.mxu0 0
  %1219 = vmatpush1.bf16.msra.mxu0 0
  %1220 = vmatprep.subr.bf16.mxu0 0
  %1221 = vmatpush1.bf16.msra.mxu0 0
  %1222 = vmatprep.subr.bf16.mxu0 0
  %1223 = vmatpush1.bf16.msra.mxu0 0
  %1224 = vmatprep.subr.bf16.mxu0 0
  %1225 = vmatpush1.bf16.msra.mxu0 0
  %1226 = vmatprep.subr.bf16.mxu0 0
  %1227 = vmatpush1.bf16.msra.mxu0 0
  %1228 = vmatprep.subr.bf16.mxu0 0
  %1229 = vmatpush1.bf16.msra.mxu0 0
  %1230 = vmatprep.mubr.bf16.mxu0 0
  %1231 = vmatmul.mubr.bf16.gmra.mrb[0].mxu0 %v1156
  %v1232 = vpop.f32.mrb[0].mxu0
  %v1233 = vadd.f32 0.0, %v1232
  %v1234 = vpop.f32.mrb[0].mxu0
  %v1235 = vadd.f32 0.0, %v1234
  %v1236 = vpop.f32.mrb[0].mxu0
  %v1237 = vpop.f32.mrb[0].mxu0
  %1238 = vdwg.mxu0
  %v1239 = vadd.f32 %v1152, %v1192
  %v1240 = vadd.f32 %v1153, %v1194
  %v1241 = vadd.f32 %v1154, %v1233
  %v1242 = vadd.f32 %v1155, %v1235
  %v1243 = vxor.u32 %v1239, 2147483648
  %v1244 = vmul.f32 %v1243, 1.442695
  %v1245 = vpow.pop %v1244
  %v1246 = vadd.f32 %v1245, 1.0
  %v1247 = vrcp.pop %v1246
  %v1248 = vmul.f32 1.0, %v1247
  %v1249 = vxor.u32 %v1240, 2147483648
  %v1250 = vmul.f32 %v1249, 1.442695
  %v1251 = vpow.pop %v1250
  %v1252 = vadd.f32 %v1251, 1.0
  %v1253 = vrcp.pop %v1252
  %v1254 = vmul.f32 1.0, %v1253
  %v1255 = vtanh.pop %v1241
  %v1256 = vxor.u32 %v1242, 2147483648
  %v1257 = vmul.f32 %v1256, 1.442695
  %v1258 = vpow.pop %v1257
  %v1259 = vadd.f32 %v1258, 1.0
  %v1260 = vrcp.pop %v1259
  %v1261 = vmul.f32 1.0, %v1260
  %v1262 = vmul.f32 %v1254, %v1140
  %v1263 = vmul.f32 %v1248, %v1255
  %v1264 = vadd.f32 %v1262, %v1263
  %v1265 = vtanh.pop %v1264
  %v1266 = vmul.f32 %v1261, %v1265
  %v1267 = vmul.f32 %v1266, %v639
  %1268 = vadd.xlane.f32.xlu0 %v1267
  %v1269 = vpop.xlane.xlu0 %1268
  %v1270 = vadd.f32 %v1269, %v648
  %s1271 = scalar_lea.vmem %s6, 40
  %1272 = vst.msk [vmem:[%s1271] sm:$0xff] %vm651, %v1270
  %s1273 = smul.u32 6, 4
  %s1274 = smul.addr %s1273, 8
  %s1275 = scalar_lea.vmem [#allocation2], %s1274
  %v1276 = vld [vmem:[%s1275] sm:$0xff]
  %v1277 = vld [vmem:[%s1275 + $0x8] sm:$0xff]
  %v1278 = vld [vmem:[%s1275 + $0x10] sm:$0xff]
  %v1279 = vld [vmem:[%s1275 + $0x18] sm:$0xff]
  %v1280 = vpack.c.bf16 %v1266, %v1266
  %1281 = vmatprep.subr.bf16.mxu0 %v462
  %1282 = vmatpush1.bf16.msra.mxu0 %v461
  %1283 = vmatprep.subr.bf16.mxu0 %v466
  %1284 = vmatpush1.bf16.msra.mxu0 %v465
  %1285 = vmatprep.subr.bf16.mxu0 %v470
  %1286 = vmatpush1.bf16.msra.mxu0 %v469
  %1287 = vmatprep.subr.bf16.mxu0 %v474
  %1288 = vmatpush1.bf16.msra.mxu0 %v473
  %1289 = vmatprep.subr.bf16.mxu0 %v478
  %1290 = vmatpush1.bf16.msra.mxu0 %v477
  %1291 = vmatprep.subr.bf16.mxu0 %v482
  %1292 = vmatpush1.bf16.msra.mxu0 %v481
  %1293 = vmatprep.subr.bf16.mxu0 %v486
  %1294 = vmatpush1.bf16.msra.mxu0 %v485
  %1295 = vmatprep.subr.bf16.mxu0 %v490
  %1296 = vmatpush1.bf16.msra.mxu0 %v489
  %1297 = vmatprep.subr.bf16.mxu0 0
  %1298 = vmatpush1.bf16.msra.mxu0 0
  %1299 = vmatprep.subr.bf16.mxu0 0
  %1300 = vmatpush1.bf16.msra.mxu0 0
  %1301 = vmatprep.subr.bf16.mxu0 0
  %1302 = vmatpush1.bf16.msra.mxu0 0
  %1303 = vmatprep.subr.bf16.mxu0 0
  %1304 = vmatpush1.bf16.msra.mxu0 0
  %1305 = vmatprep.subr.bf16.mxu0 0
  %1306 = vmatpush1.bf16.msra.mxu0 0
  %1307 = vmatprep.subr.bf16.mxu0 0
  %1308 = vmatpush1.bf16.msra.mxu0 0
  %1309 = vmatprep.subr.bf16.mxu0 0
  %1310 = vmatpush1.bf16.msra.mxu0 0
  %1311 = vmatprep.subr.bf16.mxu0 0
  %1312 = vmatpush1.bf16.msra.mxu0 0
  %1313 = vmatprep.mubr.bf16.mxu0 0
  %1314 = vmatmul.mubr.bf16.gmra.mrb[0].mxu0 %v1280
  %v1315 = vpop.f32.mrb[0].mxu0
  %v1316 = vadd.f32 0.0, %v1315
  %v1317 = vpop.f32.mrb[0].mxu0
  %v1318 = vadd.f32 0.0, %v1317
  %v1319 = vpop.f32.mrb[0].mxu0
  %v1320 = vpop.f32.mrb[0].mxu0
  %1321 = vdwg.mxu0
  %1322 = vmatprep.subr.bf16.mxu0 %v464
  %1323 = vmatpush1.bf16.msra.mxu0 %v463
  %1324 = vmatprep.subr.bf16.mxu0 %v468
  %1325 = vmatpush1.bf16.msra.mxu0 %v467
  %1326 = vmatprep.subr.bf16.mxu0 %v472
  %1327 = vmatpush1.bf16.msra.mxu0 %v471
  %1328 = vmatprep.subr.bf16.mxu0 %v476
  %1329 = vmatpush1.bf16.msra.mxu0 %v475
  %1330 = vmatprep.subr.bf16.mxu0 %v480
  %1331 = vmatpush1.bf16.msra.mxu0 %v479
  %1332 = vmatprep.subr.bf16.mxu0 %v484
  %1333 = vmatpush1.bf16.msra.mxu0 %v483
  %1334 = vmatprep.subr.bf16.mxu0 %v488
  %1335 = vmatpush1.bf16.msra.mxu0 %v487
  %1336 = vmatprep.subr.bf16.mxu0 %v492
  %1337 = vmatpush1.bf16.msra.mxu0 %v491
  %1338 = vmatprep.subr.bf16.mxu0 0
  %1339 = vmatpush1.bf16.msra.mxu0 0
  %1340 = vmatprep.subr.bf16.mxu0 0
  %1341 = vmatpush1.bf16.msra.mxu0 0
  %1342 = vmatprep.subr.bf16.mxu0 0
  %1343 = vmatpush1.bf16.msra.mxu0 0
  %1344 = vmatprep.subr.bf16.mxu0 0
  %1345 = vmatpush1.bf16.msra.mxu0 0
  %1346 = vmatprep.subr.bf16.mxu0 0
  %1347 = vmatpush1.bf16.msra.mxu0 0
  %1348 = vmatprep.subr.bf16.mxu0 0
  %1349 = vmatpush1.bf16.msra.mxu0 0
  %1350 = vmatprep.subr.bf16.mxu0 0
  %1351 = vmatpush1.bf16.msra.mxu0 0
  %1352 = vmatprep.subr.bf16.mxu0 0
  %1353 = vmatpush1.bf16.msra.mxu0 0
  %1354 = vmatprep.mubr.bf16.mxu0 0
  %1355 = vmatmul.mubr.bf16.gmra.mrb[0].mxu0 %v1280
  %v1356 = vpop.f32.mrb[0].mxu0
  %v1357 = vadd.f32 0.0, %v1356
  %v1358 = vpop.f32.mrb[0].mxu0
  %v1359 = vadd.f32 0.0, %v1358
  %v1360 = vpop.f32.mrb[0].mxu0
  %v1361 = vpop.f32.mrb[0].mxu0
  %1362 = vdwg.mxu0
  %v1363 = vadd.f32 %v1276, %v1316
  %v1364 = vadd.f32 %v1277, %v1318
  %v1365 = vadd.f32 %v1278, %v1357
  %v1366 = vadd.f32 %v1279, %v1359
  %v1367 = vxor.u32 %v1363, 2147483648
  %v1368 = vmul.f32 %v1367, 1.442695
  %v1369 = vpow.pop %v1368
  %v1370 = vadd.f32 %v1369, 1.0
  %v1371 = vrcp.pop %v1370
  %v1372 = vmul.f32 1.0, %v1371
  %v1373 = vxor.u32 %v1364, 2147483648
  %v1374 = vmul.f32 %v1373, 1.442695
  %v1375 = vpow.pop %v1374
  %v1376 = vadd.f32 %v1375, 1.0
  %v1377 = vrcp.pop %v1376
  %v1378 = vmul.f32 1.0, %v1377
  %v1379 = vtanh.pop %v1365
  %v1380 = vxor.u32 %v1366, 2147483648
  %v1381 = vmul.f32 %v1380, 1.442695
  %v1382 = vpow.pop %v1381
  %v1383 = vadd.f32 %v1382, 1.0
  %v1384 = vrcp.pop %v1383
  %v1385 = vmul.f32 1.0, %v1384
  %v1386 = vmul.f32 %v1378, %v1264
  %v1387 = vmul.f32 %v1372, %v1379
  %v1388 = vadd.f32 %v1386, %v1387
  %v1389 = vtanh.pop %v1388
  %v1390 = vmul.f32 %v1385, %v1389
  %v1391 = vmul.f32 %v1390, %v639
  %1392 = vadd.xlane.f32.xlu0 %v1391
  %v1393 = vpop.xlane.xlu0 %1392
  %v1394 = vadd.f32 %v1393, %v648
  %s1395 = scalar_lea.vmem %s6, 48
  %1396 = vst.msk [vmem:[%s1395] sm:$0xff] %vm651, %v1394
  %s1397 = smul.u32 7, 4
  %s1398 = smul.addr %s1397, 8
  %s1399 = scalar_lea.vmem [#allocation2], %s1398
  %v1400 = vld [vmem:[%s1399] sm:$0xff]
  %v1401 = vld [vmem:[%s1399 + $0x8] sm:$0xff]
  %v1402 = vld [vmem:[%s1399 + $0x10] sm:$0xff]
  %v1403 = vld [vmem:[%s1399 + $0x18] sm:$0xff]
  %v1404 = vpack.c.bf16 %v1390, %v1390
  %1405 = vmatprep.subr.bf16.mxu0 %v462
  %1406 = vmatpush1.bf16.msra.mxu0 %v461
  %1407 = vmatprep.subr.bf16.mxu0 %v466
  %1408 = vmatpush1.bf16.msra.mxu0 %v465
  %1409 = vmatprep.subr.bf16.mxu0 %v470
  %1410 = vmatpush1.bf16.msra.mxu0 %v469
  %1411 = vmatprep.subr.bf16.mxu0 %v474
  %1412 = vmatpush1.bf16.msra.mxu0 %v473
  %1413 = vmatprep.subr.bf16.mxu0 %v478
  %1414 = vmatpush1.bf16.msra.mxu0 %v477
  %1415 = vmatprep.subr.bf16.mxu0 %v482
  %1416 = vmatpush1.bf16.msra.mxu0 %v481
  %1417 = vmatprep.subr.bf16.mxu0 %v486
  %1418 = vmatpush1.bf16.msra.mxu0 %v485
  %1419 = vmatprep.subr.bf16.mxu0 %v490
  %1420 = vmatpush1.bf16.msra.mxu0 %v489
  %1421 = vmatprep.subr.bf16.mxu0 0
  %1422 = vmatpush1.bf16.msra.mxu0 0
  %1423 = vmatprep.subr.bf16.mxu0 0
  %1424 = vmatpush1.bf16.msra.mxu0 0
  %1425 = vmatprep.subr.bf16.mxu0 0
  %1426 = vmatpush1.bf16.msra.mxu0 0
  %1427 = vmatprep.subr.bf16.mxu0 0
  %1428 = vmatpush1.bf16.msra.mxu0 0
  %1429 = vmatprep.subr.bf16.mxu0 0
  %1430 = vmatpush1.bf16.msra.mxu0 0
  %1431 = vmatprep.subr.bf16.mxu0 0
  %1432 = vmatpush1.bf16.msra.mxu0 0
  %1433 = vmatprep.subr.bf16.mxu0 0
  %1434 = vmatpush1.bf16.msra.mxu0 0
  %1435 = vmatprep.subr.bf16.mxu0 0
  %1436 = vmatpush1.bf16.msra.mxu0 0
  %1437 = vmatprep.mubr.bf16.mxu0 0
  %1438 = vmatmul.mubr.bf16.gmra.mrb[0].mxu0 %v1404
  %v1439 = vpop.f32.mrb[0].mxu0
  %v1440 = vadd.f32 0.0, %v1439
  %v1441 = vpop.f32.mrb[0].mxu0
  %v1442 = vadd.f32 0.0, %v1441
  %v1443 = vpop.f32.mrb[0].mxu0
  %v1444 = vpop.f32.mrb[0].mxu0
  %1445 = vdwg.mxu0
  %1446 = vmatprep.subr.bf16.mxu0 %v464
  %1447 = vmatpush1.bf16.msra.mxu0 %v463
  %1448 = vmatprep.subr.bf16.mxu0 %v468
  %1449 = vmatpush1.bf16.msra.mxu0 %v467
  %1450 = vmatprep.subr.bf16.mxu0 %v472
  %1451 = vmatpush1.bf16.msra.mxu0 %v471
  %1452 = vmatprep.subr.bf16.mxu0 %v476
  %1453 = vmatpush1.bf16.msra.mxu0 %v475
  %1454 = vmatprep.subr.bf16.mxu0 %v480
  %1455 = vmatpush1.bf16.msra.mxu0 %v479
  %1456 = vmatprep.subr.bf16.mxu0 %v484
  %1457 = vmatpush1.bf16.msra.mxu0 %v483
  %1458 = vmatprep.subr.bf16.mxu0 %v488
  %1459 = vmatpush1.bf16.msra.mxu0 %v487
  %1460 = vmatprep.subr.bf16.mxu0 %v492
  %1461 = vmatpush1.bf16.msra.mxu0 %v491
  %1462 = vmatprep.subr.bf16.mxu0 0
  %1463 = vmatpush1.bf16.msra.mxu0 0
  %1464 = vmatprep.subr.bf16.mxu0 0
  %1465 = vmatpush1.bf16.msra.mxu0 0
  %1466 = vmatprep.subr.bf16.mxu0 0
  %1467 = vmatpush1.bf16.msra.mxu0 0
  %1468 = vmatprep.subr.bf16.mxu0 0
  %1469 = vmatpush1.bf16.msra.mxu0 0
  %1470 = vmatprep.subr.bf16.mxu0 0
  %1471 = vmatpush1.bf16.msra.mxu0 0
  %1472 = vmatprep.subr.bf16.mxu0 0
  %1473 = vmatpush1.bf16.msra.mxu0 0
  %1474 = vmatprep.subr.bf16.mxu0 0
  %1475 = vmatpush1.bf16.msra.mxu0 0
  %1476 = vmatprep.subr.bf16.mxu0 0
  %1477 = vmatpush1.bf16.msra.mxu0 0
  %1478 = vmatprep.mubr.bf16.mxu0 0
  %1479 = vmatmul.mubr.bf16.gmra.mrb[0].mxu0 %v1404
  %v1480 = vpop.f32.mrb[0].mxu0
  %v1481 = vadd.f32 0.0, %v1480
  %v1482 = vpop.f32.mrb[0].mxu0
  %v1483 = vadd.f32 0.0, %v1482
  %v1484 = vpop.f32.mrb[0].mxu0
  %v1485 = vpop.f32.mrb[0].mxu0
  %1486 = vdwg.mxu0
  %v1487 = vadd.f32 %v1400, %v1440
  %v1488 = vadd.f32 %v1401, %v1442
  %v1489 = vadd.f32 %v1402, %v1481
  %v1490 = vadd.f32 %v1403, %v1483
  %v1491 = vxor.u32 %v1487, 2147483648
  %v1492 = vmul.f32 %v1491, 1.442695
  %v1493 = vpow.pop %v1492
  %v1494 = vadd.f32 %v1493, 1.0
  %v1495 = vrcp.pop %v1494
  %v1496 = vmul.f32 1.0, %v1495
  %v1497 = vxor.u32 %v1488, 2147483648
  %v1498 = vmul.f32 %v1497, 1.442695
  %v1499 = vpow.pop %v1498
  %v1500 = vadd.f32 %v1499, 1.0
  %v1501 = vrcp.pop %v1500
  %v1502 = vmul.f32 1.0, %v1501
  %v1503 = vtanh.pop %v1489
  %v1504 = vxor.u32 %v1490, 2147483648
  %v1505 = vmul.f32 %v1504, 1.442695
  %v1506 = vpow.pop %v1505
  %v1507 = vadd.f32 %v1506, 1.0
  %v1508 = vrcp.pop %v1507
  %v1509 = vmul.f32 1.0, %v1508
  %v1510 = vmul.f32 %v1502, %v1388
  %v1511 = vmul.f32 %v1496, %v1503
  %v1512 = vadd.f32 %v1510, %v1511
  %v1513 = vtanh.pop %v1512
  %v1514 = vmul.f32 %v1509, %v1513
  %v1515 = vmul.f32 %v1514, %v639
  %1516 = vadd.xlane.f32.xlu0 %v1515
  %v1517 = vpop.xlane.xlu0 %1516
  %v1518 = vadd.f32 %v1517, %v648
  %s1519 = scalar_lea.vmem %s6, 56
  %1520 = vst.msk [vmem:[%s1519] sm:$0xff] %vm651, %v1518
  %1521 = vst [vmem:[#allocation3] sm:$0xff] %v1514
  %1522 = vst [vmem:[#allocation4] sm:$0xff] %v1512
  // Predicated region
  $region30: #{async_naive_forward.1} parent=0 // pred_check
    _
  $region31: #{async_naive_forward.1} parent=0 // pred_check_branch
    %1524 = sbr.rel (0) target = $region33
  $region32: #{async_naive_forward.1} parent=0 // pred_region
    _
  $region33: #{async_naive_forward.1} parent=0 // pred_fallthru
    _
  // Predicated region
  $region34: #{async_naive_forward.1} parent=0 // pred_check
    _
  $region35: #{async_naive_forward.1} parent=0 // pred_check_branch
    %1526 = sbr.rel (0) target = $region37
  $region36: #{async_naive_forward.1} parent=0 // pred_region
    _
  $region37: #{async_naive_forward.1} parent=0 // pred_fallthru
    _

</llo_original>
